<compile_context>
chip_gen: v5e
topology: v5e:2x2
jax: 0.10.0
libtpu: 0.0.40
codegen_flags: <defaults>
</compile_context>

<pallas_src>
import functools
import math

import jax
import jax.numpy as jnp
from jax.experimental import pallas as pl
from jax.experimental.pallas import tpu as pltpu


def _round_up(a: int, b: int) -> int:
    return (a + b - 1) // b * b


# ---------------------------------------------------------------------------
# Kernel 1: RMSNorm1 + multi-head attention + residual   (grid over batch)
# ---------------------------------------------------------------------------
def _mha_kernel(x_ref, g1_ref, wq_ref, bq_ref, wk_ref, bk_ref, wv_ref, bv_ref,
                wo_ref, bo_ref, o_ref, *, num_heads, d_k, d_model, eps):
    # x_ref: (S, Dp) feature-padded rows of one batch element (padding = 0).
    x = x_ref[...].astype(jnp.float32)

    # RMSNorm1 — mean over the TRUE d_model (padded columns contribute 0).
    ssq = jnp.sum(x * x, axis=-1, keepdims=True)
    inv = jax.lax.rsqrt(ssq / d_model + eps)
    xn = (x * inv) * g1_ref[...]

    acc = jnp.zeros_like(x)                    # (S, Dp) f32 attention output
    nt = (((1,), (1,)), ((), ()))              # contract last dims: a @ b.T
    for h in range(num_heads):                 # unrolled; per-head 2-D dots only
        xh = xn.astype(wq_ref.dtype)
        q = jax.lax.dot_general(xh, wq_ref[h], nt,
                                preferred_element_type=jnp.float32) + bq_ref[h]
        k = jax.lax.dot_general(xh, wk_ref[h], nt,
                                preferred_element_type=jnp.float32) + bk_ref[h]
        v = jax.lax.dot_general(xh, wv_ref[h], nt,
                                preferred_element_type=jnp.float32) + bv_ref[h]
        s = jax.lax.dot_general(q, k, nt, preferred_element_type=jnp.float32)
        s = s / math.sqrt(d_k)
        s = s - jnp.max(s, axis=-1, keepdims=True)
        p = jnp.exp(s)
        p = p / jnp.sum(p, axis=-1, keepdims=True)
        ctx = jnp.dot(p, v, preferred_element_type=jnp.float32)
        acc = acc + jnp.dot(ctx.astype(wo_ref.dtype), wo_ref[h],
                            preferred_element_type=jnp.float32)

    # residual + output-projection bias (added once).
    o_ref[...] = (x + acc + bo_ref[...]).astype(o_ref.dtype)


# ---------------------------------------------------------------------------
# Kernel 2: RMSNorm2 + FFN + residual   (grid = (row tiles, d_ff chunks))
# ---------------------------------------------------------------------------
def _ffn_kernel(x_ref, g2_ref, w1_ref, b1_ref, w2_ref, b2_ref, o_ref,
                xn_ref, acc_ref, *, d_model, eps):
    kc = pl.program_id(1)

    @pl.when(kc == 0)
    def _init():
        x = x_ref[...].astype(jnp.float32)
        ssq = jnp.sum(x * x, axis=-1, keepdims=True)      # padded cols are 0
        inv = jax.lax.rsqrt(ssq / d_model + eps)
        xn_ref[...] = (x * inv) * g2_ref[...]              # normed rows, reused for all chunks
        acc_ref[...] = jnp.zeros_like(acc_ref)

    # Chunk of the hidden layer: h_k = relu(xn @ W1[:, chunk] + b1[chunk])
    h = jnp.dot(xn_ref[...].astype(w1_ref.dtype), w1_ref[...],
                preferred_element_type=jnp.float32) + b1_ref[...]
    h = jnp.maximum(h, 0.0)
    # Accumulate the second matmul's K-reduction in f32 VMEM scratch.
    acc_ref[...] += jnp.dot(h.astype(w2_ref.dtype), w2_ref[...],
                            preferred_element_type=jnp.float32)

    @pl.when(kc == pl.num_programs(1) - 1)
    def _finalize():
        y = x_ref[...].astype(jnp.float32) + acc_ref[...] + b2_ref[...]
        o_ref[...] = y.astype(o_ref.dtype)


# ---------------------------------------------------------------------------
# Wrapper
# ---------------------------------------------------------------------------
def mha_block_forward(x, params, *, num_heads, eps=1e-6, tm=256, kf=512,
                      compute_dtype=None, vmem_limit_bytes=48 * 1024 * 1024):
    """x: [B, S, d_model].  params uses the x @ W convention (pre-transposed
    relative to nn.Linear): wqkv [d_model, 3*d_model], wo [d_model, d_model],
    w1 [d_model, d_ff], w2 [d_ff, d_model]; biases/g1/g2 are 1-D."""
    B, S, d_model = x.shape
    d_ff = params["w1"].shape[1]
    assert d_model % num_heads == 0
    d_k = d_model // num_heads
    out_dtype = x.dtype
    cdt = compute_dtype or x.dtype           # bf16 here for v6e/v7x speed

    # ---- pad the feature dim to a multiple of 128 (lane-dense stores) ----
    Dp = _round_up(d_model, 128)
    pad_d = Dp - d_model

    def pad_last(a):
        if pad_d == 0:
            return a
        cfg = [(0, 0)] * (a.ndim - 1) + [(0, pad_d)]
        return jnp.pad(a, cfg)

    xp = pad_last(x)                                              # [B, S, Dp]
    g1 = pad_last(params["g1"].reshape(1, d_model)).astype(jnp.float32)
    g2 = pad_last(params["g2"].reshape(1, d_model)).astype(jnp.float32)

    # ---- per-head weight stacks: [H, d_k, Dp] (lane dim = padded d_model) ----
    wqkv, bqkv = params["wqkv"], params["bqkv"]

    def head_stack(w_cols):   # [d_model, d_model] -> [H, d_k, d_model]
        return jnp.transpose(w_cols.reshape(d_model, num_heads, d_k), (1, 2, 0))

    wq = pad_last(head_stack(wqkv[:, 0 * d_model:1 * d_model])).astype(cdt)
    wk = pad_last(head_stack(wqkv[:, 1 * d_model:2 * d_model])).astype(cdt)
    wv = pad_last(head_stack(wqkv[:, 2 * d_model:3 * d_model])).astype(cdt)
    bq = bqkv[0 * d_model:1 * d_model].reshape(num_heads, 1, d_k).astype(jnp.float32)
    bk = bqkv[1 * d_model:2 * d_model].reshape(num_heads, 1, d_k).astype(jnp.float32)
    bv = bqkv[2 * d_model:3 * d_model].reshape(num_heads, 1, d_k).astype(jnp.float32)
    wo = pad_last(params["wo"].reshape(num_heads, d_k, d_model)).astype(cdt)
    bo = pad_last(params["bo"].reshape(1, d_model)).astype(jnp.float32)

    # TODO(synk): use pipeline_mode=pl.Buffered(1) on the constant-index weight
    # BlockSpecs to halve their VMEM footprint once single-buffering is verified
    # on the installed jax.

    mha_k = functools.partial(_mha_kernel, num_heads=num_heads, d_k=d_k,
                              d_model=d_model, eps=eps)
    y1 = pl.pallas_call(
        mha_k,
        out_shape=jax.ShapeDtypeStruct((B, S, Dp), out_dtype),
        grid_spec=pltpu.PrefetchScalarGridSpec(
            num_scalar_prefetch=0,
            grid=(B,),
            in_specs=[
                pl.BlockSpec((None, S, Dp), lambda b: (b, 0, 0)),            # x
                pl.BlockSpec((1, Dp), lambda b: (0, 0)),                     # g1
                pl.BlockSpec((num_heads, d_k, Dp), lambda b: (0, 0, 0)),     # Wq
                pl.BlockSpec((num_heads, 1, d_k), lambda b: (0, 0, 0)),      # bq
                pl.BlockSpec((num_heads, d_k, Dp), lambda b: (0, 0, 0)),     # Wk
                pl.BlockSpec((num_heads, 1, d_k), lambda b: (0, 0, 0)),      # bk
                pl.BlockSpec((num_heads, d_k, Dp), lambda b: (0, 0, 0)),     # Wv
                pl.BlockSpec((num_heads, 1, d_k), lambda b: (0, 0, 0)),      # bv
                pl.BlockSpec((num_heads, d_k, Dp), lambda b: (0, 0, 0)),     # Wo
                pl.BlockSpec((1, Dp), lambda b: (0, 0)),                     # bo
            ],
            out_specs=pl.BlockSpec((None, S, Dp), lambda b: (b, 0, 0)),
        ),
        compiler_params=pltpu.CompilerParams(
            dimension_semantics=("parallel",),
            vmem_limit_bytes=vmem_limit_bytes,
        ),
    )(xp, g1, wq, bq, wk, bk, wv, bv, wo, bo)

    # ---- FFN half: rows tiled (parallel), d_ff chunked (arbitrary) ----
    M = B * S
    tm_eff = min(tm, _round_up(M, 8))
    Mp = _round_up(M, tm_eff)
    kf_eff = min(kf, d_ff)
    Fp = _round_up(d_ff, kf_eff)

    y2d = y1.reshape(M, Dp)
    if Mp != M:
        y2d = jnp.pad(y2d, ((0, Mp - M), (0, 0)))

    w1p = jnp.pad(params["w1"].astype(cdt), ((0, pad_d), (0, Fp - d_ff)))
    w2p = jnp.pad(params["w2"].astype(cdt), ((0, Fp - d_ff), (0, pad_d)))
    b1p = jnp.pad(params["b1"].astype(jnp.float32).reshape(1, d_ff),
                  ((0, 0), (0, Fp - d_ff)))
    b2p = pad_last(params["b2"].astype(jnp.float32).reshape(1, d_model))

    ffn_k = functools.partial(_ffn_kernel, d_model=d_model, eps=eps)
    out2d = pl.pallas_call(
        ffn_k,
        out_shape=jax.ShapeDtypeStruct((Mp, Dp), out_dtype),
        grid_spec=pltpu.PrefetchScalarGridSpec(
            num_scalar_prefetch=0,
            grid=(Mp // tm_eff, Fp // kf_eff),
            in_specs=[
                pl.BlockSpec((tm_eff, Dp), lambda i, k: (i, 0)),   # rows (norm in + residual)
                pl.BlockSpec((1, Dp), lambda i, k: (0, 0)),        # g2
                pl.BlockSpec((Dp, kf_eff), lambda i, k: (0, k)),   # W1 column tile (streamed)
                pl.BlockSpec((1, kf_eff), lambda i, k: (0, k)),    # b1 tile
                pl.BlockSpec((kf_eff, Dp), lambda i, k: (k, 0)),   # W2 row tile (streamed)
                pl.BlockSpec((1, Dp), lambda i, k: (0, 0)),        # b2
            ],
            out_specs=pl.BlockSpec((tm_eff, Dp), lambda i, k: (i, 0)),
            scratch_shapes=[
                pltpu.VMEM((tm_eff, Dp), jnp.float32),   # normed rows
                pltpu.VMEM((tm_eff, Dp), jnp.float32),   # f32 accumulator
            ],
        ),
        compiler_params=pltpu.CompilerParams(
            dimension_semantics=("parallel", "arbitrary"),
            vmem_limit_bytes=vmem_limit_bytes,
        ),
    )(y2d, g2, w1p, b1p, w2p, b2p)

    return out2d[:M, :d_model].reshape(B, S, d_model)


# ---------------------------------------------------------------------------
# Pure-JAX reference (mirrors the PyTorch module)
# ---------------------------------------------------------------------------
def _rmsnorm_ref(x, g, eps):
    ms = jnp.mean(x * x, axis=-1, keepdims=True) + eps
    return g * (x * jax.lax.rsqrt(ms))


def mha_block_ref(x, params, *, num_heads, eps=1e-6):
    B, S, D = x.shape
    d_k = D // num_heads

    xn = _rmsnorm_ref(x, params["g1"], eps)
    qkv = xn @ params["wqkv"] + params["bqkv"]
    q, k, v = qkv[..., :D], qkv[..., D:2 * D], qkv[..., 2 * D:]

    def split(t):
        return t.reshape(B, S, num_heads, d_k).transpose(0, 2, 1, 3)

    q, k, v = split(q), split(k), split(v)
    s = jnp.einsum("bhqd,bhkd->bhqk", q, k) / jnp.sqrt(jnp.float32(d_k))
    p = jax.nn.softmax(s, axis=-1)
    ctx = jnp.einsum("bhqk,bhkd->bhqd", p, v)
    ctx = ctx.transpose(0, 2, 1, 3).reshape(B, S, D)
    x = x + ctx @ params["wo"] + params["bo"]

    xn = _rmsnorm_ref(x, params["g2"], eps)
    h = jnp.maximum(xn @ params["w1"] + params["b1"], 0.0)
    return x + h @ params["w2"] + params["b2"]


if __name__ == "__main__":
    B, S, d_model, num_heads = 2, 8, 32, 4
    d_ff = 4 * d_model

    key = jax.random.PRNGKey(0)
    ks = jax.random.split(key, 12)

    def linear_init(kw, kb, fan_in, shape_w, shape_b):
        bound = 1.0 / math.sqrt(fan_in)
        w = jax.random.uniform(kw, shape_w, jnp.float32, -bound, bound)
        b = jax.random.uniform(kb, shape_b, jnp.float32, -bound, bound)
        return w, b

    x = jax.random.normal(ks[0], (B, S, d_model), dtype=jnp.float32)
    wqkv, bqkv = linear_init(ks[1], ks[2], d_model, (d_model, 3 * d_model), (3 * d_model,))
    wo, bo = linear_init(ks[3], ks[4], d_model, (d_model, d_model), (d_model,))
    w1, b1 = linear_init(ks[5], ks[6], d_model, (d_model, d_ff), (d_ff,))
    w2, b2 = linear_init(ks[7], ks[8], d_ff, (d_ff, d_model), (d_model,))
    # Non-trivial RMSNorm gains to exercise the norm path (module inits to ones).
    g1 = jax.random.uniform(ks[9], (d_model,), jnp.float32, 0.5, 1.5)
    g2 = jax.random.uniform(ks[10], (d_model,), jnp.float32, 0.5, 1.5)

    params = dict(g1=g1, g2=g2, wqkv=wqkv, bqkv=bqkv, wo=wo, bo=bo,
                  w1=w1, b1=b1, w2=w2, b2=b2)

    fwd = jax.jit(functools.partial(mha_block_forward, num_heads=num_heads))
    y = jax.block_until_ready(fwd(x, params))

    y_ref = mha_block_ref(x, params, num_heads=num_heads)
    assert y.shape == (B, S, d_model)
    err = float(jnp.max(jnp.abs(y - y_ref)))
    # Loose-ish tolerance: MXU default-precision f32 matmul paths may differ
    # slightly between the kernel and the XLA reference.
    assert jnp.allclose(y, y_ref, atol=2e-2, rtol=2e-2), f"mismatch vs reference (max abs err {err})"

    print("KERNEL_OK")
</pallas_src>

<mosaic_0001>
module attributes {stable_mosaic.version = 11 : i64} {
  func.func @_ffn_kernel(%arg0: i32, %arg1: i32, %arg2: memref<16x128xf32, #tpu.memory_space<vmem>>, %arg3: memref<1x128xf32, #tpu.memory_space<vmem>>, %arg4: memref<128x128xf32, #tpu.memory_space<vmem>>, %arg5: memref<1x128xf32, #tpu.memory_space<vmem>>, %arg6: memref<128x128xf32, #tpu.memory_space<vmem>>, %arg7: memref<1x128xf32, #tpu.memory_space<vmem>>, %arg8: memref<16x128xf32, #tpu.memory_space<vmem>>, %arg9: memref<16x128xf32, #tpu.memory_space<vmem>>, %arg10: memref<16x128xf32, #tpu.memory_space<vmem>>) attributes {dimension_semantics = [#tpu.dimension_semantics<parallel>, #tpu.dimension_semantics<arbitrary>], iteration_bounds = array<i64: 1, 1>, scalar_prefetch = 0 : i64, scratch_operands = 2 : i64, tpu.core_type = #tpu.core_type<tc>, window_params = [{transform_indices = @transform_0, window_bounds = array<i64: 16, 128>}, {pipeline_mode = #tpu.pipeline_mode<synchronous>, transform_indices = @transform_1, window_bounds = array<i64: 1, 128>}, {transform_indices = @transform_2, window_bounds = array<i64: 128, 128>}, {transform_indices = @transform_3, window_bounds = array<i64: 1, 128>}, {transform_indices = @transform_4, window_bounds = array<i64: 128, 128>}, {pipeline_mode = #tpu.pipeline_mode<synchronous>, transform_indices = @transform_5, window_bounds = array<i64: 1, 128>}, {transform_indices = @transform_6, window_bounds = array<i64: 16, 128>}]} {
    %c0_i32 = arith.constant 0 : i32
    %0 = arith.cmpi eq, %arg1, %c0_i32 : i32
    %1 = arith.extui %0 : i1 to i32
    %c0_i32_0 = arith.constant 0 : i32
    %2 = arith.cmpi ne, %1, %c0_i32_0 : i32
    scf.if %2 {
      %c0_16 = arith.constant 0 : index
      %c0_17 = arith.constant 0 : index
      %19 = vector.load %arg2[%c0_16, %c0_17] : memref<16x128xf32, #tpu.memory_space<vmem>>, vector<16x128xf32>
      %20 = arith.mulf %19, %19 : vector<16x128xf32>
      %cst_18 = arith.constant dense<0.000000e+00> : vector<16xf32>
      %21 = vector.multi_reduction <add>, %20, %cst_18 [1] : vector<16x128xf32> to vector<16xf32>
      %22 = vector.shape_cast %21 : vector<16xf32> to vector<16x1xf32>
      %cst_19 = arith.constant 3.200000e+01 : f32
      %23 = vector.broadcast %cst_19 : f32 to vector<16x1xf32>
      %24 = arith.divf %22, %23 : vector<16x1xf32>
      %cst_20 = arith.constant 9.99999997E-7 : f32
      %25 = vector.broadcast %cst_20 : f32 to vector<16x1xf32>
      %26 = arith.addf %24, %25 : vector<16x1xf32>
      %27 = math.rsqrt %26 : vector<16x1xf32>
      %28 = vector.broadcast %27 : vector<16x1xf32> to vector<16x128xf32>
      %29 = arith.mulf %19, %28 : vector<16x128xf32>
      %c0_21 = arith.constant 0 : index
      %c0_22 = arith.constant 0 : index
      %30 = vector.load %arg3[%c0_21, %c0_22] : memref<1x128xf32, #tpu.memory_space<vmem>>, vector<1x128xf32>
      %31 = vector.broadcast %30 : vector<1x128xf32> to vector<16x128xf32>
      %32 = arith.mulf %29, %31 : vector<16x128xf32>
      %c0_23 = arith.constant 0 : index
      %c0_24 = arith.constant 0 : index
      %33 = vector.load %arg9[%c0_23, %c0_24] : memref<16x128xf32, #tpu.memory_space<vmem>>, vector<16x128xf32>
      tpu.vector_store %arg9[%c0_23, %c0_24], %32 {strides = array<i32>} : memref<16x128xf32, #tpu.memory_space<vmem>>, vector<16x128xf32>,
      %cst_25 = arith.constant 0.000000e+00 : f32
      %34 = vector.broadcast %cst_25 : f32 to vector<16x128xf32>
      %c0_26 = arith.constant 0 : index
      %c0_27 = arith.constant 0 : index
      %35 = vector.load %arg10[%c0_26, %c0_27] : memref<16x128xf32, #tpu.memory_space<vmem>>, vector<16x128xf32>
      tpu.vector_store %arg10[%c0_26, %c0_27], %34 {strides = array<i32>} : memref<16x128xf32, #tpu.memory_space<vmem>>, vector<16x128xf32>,
    } else {
    }
    %c0 = arith.constant 0 : index
    %c0_1 = arith.constant 0 : index
    %3 = vector.load %arg9[%c0, %c0_1] : memref<16x128xf32, #tpu.memory_space<vmem>>, vector<16x128xf32>
    %c0_2 = arith.constant 0 : index
    %c0_3 = arith.constant 0 : index
    %4 = vector.load %arg4[%c0_2, %c0_3] : memref<128x128xf32, #tpu.memory_space<vmem>>, vector<128x128xf32>
    %cst = arith.constant dense<0.000000e+00> : vector<16x128xf32>
    %5 = tpu.matmul %3, %4, %cst {dimension_numbers = #tpu.dot_dimension_numbers<[1], [0], [0], [1], [0, 0, 1, 1], [], []>} : vector<16x128xf32>, vector<128x128xf32>, vector<16x128xf32> -> vector<16x128xf32>
    %c0_4 = arith.constant 0 : index
    %c0_5 = arith.constant 0 : index
    %6 = vector.load %arg5[%c0_4, %c0_5] : memref<1x128xf32, #tpu.memory_space<vmem>>, vector<1x128xf32>
    %7 = vector.broadcast %6 : vector<1x128xf32> to vector<16x128xf32>
    %8 = arith.addf %5, %7 : vector<16x128xf32>
    %cst_6 = arith.constant 0.000000e+00 : f32
    %9 = vector.broadcast %cst_6 : f32 to vector<16x128xf32>
    %10 = arith.maximumf %8, %9 : vector<16x128xf32>
    %c0_7 = arith.constant 0 : index
    %c0_8 = arith.constant 0 : index
    %11 = vector.load %arg10[%c0_7, %c0_8] : memref<16x128xf32, #tpu.memory_space<vmem>>, vector<16x128xf32>
    %c0_9 = arith.constant 0 : index
    %c0_10 = arith.constant 0 : index
    %12 = vector.load %arg6[%c0_9, %c0_10] : memref<128x128xf32, #tpu.memory_space<vmem>>, vector<128x128xf32>
    %cst_11 = arith.constant dense<0.000000e+00> : vector<16x128xf32>
    %13 = tpu.matmul %10, %12, %cst_11 {dimension_numbers = #tpu.dot_dimension_numbers<[1], [0], [0], [1], [0, 0, 1, 1], [], []>} : vector<16x128xf32>, vector<128x128xf32>, vector<16x128xf32> -> vector<16x128xf32>
    %14 = arith.addf %11, %13 : vector<16x128xf32>
    %c0_12 = arith.constant 0 : index
    %c0_13 = arith.constant 0 : index
    %15 = vector.load %arg10[%c0_12, %c0_13] : memref<16x128xf32, #tpu.memory_space<vmem>>, vector<16x128xf32>
    tpu.vector_store %arg10[%c0_12, %c0_13], %14 {strides = array<i32>} : memref<16x128xf32, #tpu.memory_space<vmem>>, vector<16x128xf32>,
    %c0_i32_14 = arith.constant 0 : i32
    %16 = arith.cmpi eq, %arg1, %c0_i32_14 : i32
    %17 = arith.extui %16 : i1 to i32
    %c0_i32_15 = arith.constant 0 : i32
    %18 = arith.cmpi ne, %17, %c0_i32_15 : i32
    scf.if %18 {
      %c0_16 = arith.constant 0 : index
      %c0_17 = arith.constant 0 : index
      %19 = vector.load %arg2[%c0_16, %c0_17] : memref<16x128xf32, #tpu.memory_space<vmem>>, vector<16x128xf32>
      %c0_18 = arith.constant 0 : index
      %c0_19 = arith.constant 0 : index
      %20 = vector.load %arg10[%c0_18, %c0_19] : memref<16x128xf32, #tpu.memory_space<vmem>>, vector<16x128xf32>
      %21 = arith.addf %19, %20 : vector<16x128xf32>
      %c0_20 = arith.constant 0 : index
      %c0_21 = arith.constant 0 : index
      %22 = vector.load %arg7[%c0_20, %c0_21] : memref<1x128xf32, #tpu.memory_space<vmem>>, vector<1x128xf32>
      %23 = vector.broadcast %22 : vector<1x128xf32> to vector<16x128xf32>
      %24 = arith.addf %21, %23 : vector<16x128xf32>
      %c0_22 = arith.constant 0 : index
      %c0_23 = arith.constant 0 : index
      %25 = vector.load %arg8[%c0_22, %c0_23] : memref<16x128xf32, #tpu.memory_space<vmem>>, vector<16x128xf32>
      tpu.vector_store %arg8[%c0_22, %c0_23], %24 {strides = array<i32>} : memref<16x128xf32, #tpu.memory_space<vmem>>, vector<16x128xf32>,
    } else {
    }
    return
  }
  func.func @transform_0(%arg0: i32, %arg1: i32) -> (i32, i32) {
    %c0_i32 = arith.constant 0 : i32
    %c0_i32_0 = arith.constant 0 : i32
    return %arg0, %c0_i32 : i32, i32
  }
  func.func @transform_1(%arg0: i32, %arg1: i32) -> (i32, i32) {
    %c0_i32 = arith.constant 0 : i32
    %c0_i32_0 = arith.constant 0 : i32
    %c0_i32_1 = arith.constant 0 : i32
    return %c0_i32, %c0_i32_0 : i32, i32
  }
  func.func @transform_2(%arg0: i32, %arg1: i32) -> (i32, i32) {
    %c0_i32 = arith.constant 0 : i32
    %c0_i32_0 = arith.constant 0 : i32
    return %c0_i32, %arg1 : i32, i32
  }
  func.func @transform_3(%arg0: i32, %arg1: i32) -> (i32, i32) {
    %c0_i32 = arith.constant 0 : i32
    %c0_i32_0 = arith.constant 0 : i32
    return %c0_i32, %arg1 : i32, i32
  }
  func.func @transform_4(%arg0: i32, %arg1: i32) -> (i32, i32) {
    %c0_i32 = arith.constant 0 : i32
    %c0_i32_0 = arith.constant 0 : i32
    return %arg1, %c0_i32 : i32, i32
  }
  func.func @transform_5(%arg0: i32, %arg1: i32) -> (i32, i32) {
    %c0_i32 = arith.constant 0 : i32
    %c0_i32_0 = arith.constant 0 : i32
    %c0_i32_1 = arith.constant 0 : i32
    return %c0_i32, %c0_i32_0 : i32, i32
  }
  func.func @transform_6(%arg0: i32, %arg1: i32) -> (i32, i32) {
    %c0_i32 = arith.constant 0 : i32
    %c0_i32_0 = arith.constant 0 : i32
    return %arg0, %c0_i32 : i32, i32
  }
}

module attributes {stable_mosaic.version = 11 : i64} {
  func.func @_mha_kernel(%arg0: i32, %arg1: memref<1x8x128xf32, #tpu.memory_space<vmem>>, %arg2: memref<1x128xf32, #tpu.memory_space<vmem>>, %arg3: memref<4x8x128xf32, #tpu.memory_space<vmem>>, %arg4: memref<4x1x8xf32, #tpu.memory_space<vmem>>, %arg5: memref<4x8x128xf32, #tpu.memory_space<vmem>>, %arg6: memref<4x1x8xf32, #tpu.memory_space<vmem>>, %arg7: memref<4x8x128xf32, #tpu.memory_space<vmem>>, %arg8: memref<4x1x8xf32, #tpu.memory_space<vmem>>, %arg9: memref<4x8x128xf32, #tpu.memory_space<vmem>>, %arg10: memref<1x128xf32, #tpu.memory_space<vmem>>, %arg11: memref<1x8x128xf32, #tpu.memory_space<vmem>>) attributes {dimension_semantics = [#tpu.dimension_semantics<parallel>], iteration_bounds = array<i64: 2>, scalar_prefetch = 0 : i64, scratch_operands = 0 : i64, tpu.core_type = #tpu.core_type<tc>, window_params = [{transform_indices = @transform_0, window_bounds = array<i64: 1, 8, 128>}, {pipeline_mode = #tpu.pipeline_mode<synchronous>, transform_indices = @transform_1, window_bounds = array<i64: 1, 128>}, {pipeline_mode = #tpu.pipeline_mode<synchronous>, transform_indices = @transform_2, window_bounds = array<i64: 4, 8, 128>}, {pipeline_mode = #tpu.pipeline_mode<synchronous>, transform_indices = @transform_3, window_bounds = array<i64: 4, 1, 8>}, {pipeline_mode = #tpu.pipeline_mode<synchronous>, transform_indices = @transform_4, window_bounds = array<i64: 4, 8, 128>}, {pipeline_mode = #tpu.pipeline_mode<synchronous>, transform_indices = @transform_5, window_bounds = array<i64: 4, 1, 8>}, {pipeline_mode = #tpu.pipeline_mode<synchronous>, transform_indices = @transform_6, window_bounds = array<i64: 4, 8, 128>}, {pipeline_mode = #tpu.pipeline_mode<synchronous>, transform_indices = @transform_7, window_bounds = array<i64: 4, 1, 8>}, {pipeline_mode = #tpu.pipeline_mode<synchronous>, transform_indices = @transform_8, window_bounds = array<i64: 4, 8, 128>}, {pipeline_mode = #tpu.pipeline_mode<synchronous>, transform_indices = @transform_9, window_bounds = array<i64: 1, 128>}, {transform_indices = @transform_10, window_bounds = array<i64: 1, 8, 128>}]} {
    %c0 = arith.constant 0 : index
    %c0_0 = arith.constant 0 : index
    %c0_1 = arith.constant 0 : index
    %0 = vector.load %arg1[%c0, %c0_0, %c0_1] : memref<1x8x128xf32, #tpu.memory_space<vmem>>, vector<1x8x128xf32>
    %1 = vector.shape_cast %0 : vector<1x8x128xf32> to vector<8x128xf32>
    %2 = arith.mulf %1, %1 : vector<8x128xf32>
    %cst = arith.constant dense<0.000000e+00> : vector<8xf32>
    %3 = vector.multi_reduction <add>, %2, %cst [1] : vector<8x128xf32> to vector<8xf32>
    %4 = vector.shape_cast %3 : vector<8xf32> to vector<8x1xf32>
    %cst_2 = arith.constant 3.200000e+01 : f32
    %5 = vector.broadcast %cst_2 : f32 to vector<8x1xf32>
    %6 = arith.divf %4, %5 : vector<8x1xf32>
    %cst_3 = arith.constant 9.99999997E-7 : f32
    %7 = vector.broadcast %cst_3 : f32 to vector<8x1xf32>
    %8 = arith.addf %6, %7 : vector<8x1xf32>
    %9 = math.rsqrt %8 : vector<8x1xf32>
    %10 = vector.broadcast %9 : vector<8x1xf32> to vector<8x128xf32>
    %11 = arith.mulf %1, %10 : vector<8x128xf32>
    %c0_4 = arith.constant 0 : index
    %c0_5 = arith.constant 0 : index
    %12 = vector.load %arg2[%c0_4, %c0_5] : memref<1x128xf32, #tpu.memory_space<vmem>>, vector<1x128xf32>
    %13 = vector.broadcast %12 : vector<1x128xf32> to vector<8x128xf32>
    %14 = arith.mulf %11, %13 : vector<8x128xf32>
    %cst_6 = arith.constant 0.000000e+00 : f32
    %15 = vector.broadcast %cst_6 : f32 to vector<8x128xf32>
    %c0_7 = arith.constant 0 : index
    %c0_8 = arith.constant 0 : index
    %c0_9 = arith.constant 0 : index
    %16 = vector.load %arg3[%c0_7, %c0_8, %c0_9] : memref<4x8x128xf32, #tpu.memory_space<vmem>>, vector<1x8x128xf32>
    %17 = vector.shape_cast %16 : vector<1x8x128xf32> to vector<8x128xf32>
    %cst_10 = arith.constant dense<0.000000e+00> : vector<8x8xf32>
    %18 = tpu.matmul %14, %17, %cst_10 {dimension_numbers = #tpu.dot_dimension_numbers<[1], [1], [0], [0], [0, 0, 1, 0], [], []>} : vector<8x128xf32>, vector<8x128xf32>, vector<8x8xf32> -> vector<8x8xf32>
    %c0_11 = arith.constant 0 : index
    %c0_12 = arith.constant 0 : index
    %c0_13 = arith.constant 0 : index
    %19 = vector.load %arg4[%c0_11, %c0_12, %c0_13] : memref<4x1x8xf32, #tpu.memory_space<vmem>>, vector<1x1x8xf32>
    %20 = vector.shape_cast %19 : vector<1x1x8xf32> to vector<1x8xf32>
    %21 = vector.broadcast %20 : vector<1x8xf32> to vector<8x8xf32>
    %22 = arith.addf %18, %21 : vector<8x8xf32>
    %c0_14 = arith.constant 0 : index
    %c0_15 = arith.constant 0 : index
    %c0_16 = arith.constant 0 : index
    %23 = vector.load %arg5[%c0_14, %c0_15, %c0_16] : memref<4x8x128xf32, #tpu.memory_space<vmem>>, vector<1x8x128xf32>
    %24 = vector.shape_cast %23 : vector<1x8x128xf32> to vector<8x128xf32>
    %cst_17 = arith.constant dense<0.000000e+00> : vector<8x8xf32>
    %25 = tpu.matmul %14, %24, %cst_17 {dimension_numbers = #tpu.dot_dimension_numbers<[1], [1], [0], [0], [0, 0, 1, 0], [], []>} : vector<8x128xf32>, vector<8x128xf32>, vector<8x8xf32> -> vector<8x8xf32>
    %c0_18 = arith.constant 0 : index
    %c0_19 = arith.constant 0 : index
    %c0_20 = arith.constant 0 : index
    %26 = vector.load %arg6[%c0_18, %c0_19, %c0_20] : memref<4x1x8xf32, #tpu.memory_space<vmem>>, vector<1x1x8xf32>
    %27 = vector.shape_cast %26 : vector<1x1x8xf32> to vector<1x8xf32>
    %28 = vector.broadcast %27 : vector<1x8xf32> to vector<8x8xf32>
    %29 = arith.addf %25, %28 : vector<8x8xf32>
    %c0_21 = arith.constant 0 : index
    %c0_22 = arith.constant 0 : index
    %c0_23 = arith.constant 0 : index
    %30 = vector.load %arg7[%c0_21, %c0_22, %c0_23] : memref<4x8x128xf32, #tpu.memory_space<vmem>>, vector<1x8x128xf32>
    %31 = vector.shape_cast %30 : vector<1x8x128xf32> to vector<8x128xf32>
    %cst_24 = arith.constant dense<0.000000e+00> : vector<8x8xf32>
    %32 = tpu.matmul %14, %31, %cst_24 {dimension_numbers = #tpu.dot_dimension_numbers<[1], [1], [0], [0], [0, 0, 1, 0], [], []>} : vector<8x128xf32>, vector<8x128xf32>, vector<8x8xf32> -> vector<8x8xf32>
    %c0_25 = arith.constant 0 : index
    %c0_26 = arith.constant 0 : index
    %c0_27 = arith.constant 0 : index
    %33 = vector.load %arg8[%c0_25, %c0_26, %c0_27] : memref<4x1x8xf32, #tpu.memory_space<vmem>>, vector<1x1x8xf32>
    %34 = vector.shape_cast %33 : vector<1x1x8xf32> to vector<1x8xf32>
    %35 = vector.broadcast %34 : vector<1x8xf32> to vector<8x8xf32>
    %36 = arith.addf %32, %35 : vector<8x8xf32>
    %cst_28 = arith.constant dense<0.000000e+00> : vector<8x8xf32>
    %37 = tpu.matmul %22, %29, %cst_28 {dimension_numbers = #tpu.dot_dimension_numbers<[1], [1], [0], [0], [0, 0, 1, 0], [], []>} : vector<8x8xf32>, vector<8x8xf32>, vector<8x8xf32> -> vector<8x8xf32>
    %cst_29 = arith.constant 2.82842708 : f32
    %38 = vector.broadcast %cst_29 : f32 to vector<8x8xf32>
    %39 = arith.divf %37, %38 : vector<8x8xf32>
    %cst_30 = arith.constant dense<0xFF800000> : vector<8xf32>
    %40 = vector.multi_reduction <maximumf>, %39, %cst_30 [1] : vector<8x8xf32> to vector<8xf32>
    %41 = vector.shape_cast %40 : vector<8xf32> to vector<8x1xf32>
    %42 = vector.broadcast %41 : vector<8x1xf32> to vector<8x8xf32>
    %43 = arith.subf %39, %42 : vector<8x8xf32>
    %44 = math.exp %43 : vector<8x8xf32>
    %cst_31 = arith.constant dense<0.000000e+00> : vector<8xf32>
    %45 = vector.multi_reduction <add>, %44, %cst_31 [1] : vector<8x8xf32> to vector<8xf32>
    %46 = vector.shape_cast %45 : vector<8xf32> to vector<8x1xf32>
    %47 = vector.broadcast %46 : vector<8x1xf32> to vector<8x8xf32>
    %48 = arith.divf %44, %47 : vector<8x8xf32>
    %cst_32 = arith.constant dense<0.000000e+00> : vector<8x8xf32>
    %49 = tpu.matmul %48, %36, %cst_32 {dimension_numbers = #tpu.dot_dimension_numbers<[1], [0], [0], [1], [0, 0, 1, 1], [], []>} : vector<8x8xf32>, vector<8x8xf32>, vector<8x8xf32> -> vector<8x8xf32>
    %c0_33 = arith.constant 0 : index
    %c0_34 = arith.constant 0 : index
    %c0_35 = arith.constant 0 : index
    %50 = vector.load %arg9[%c0_33, %c0_34, %c0_35] : memref<4x8x128xf32, #tpu.memory_space<vmem>>, vector<1x8x128xf32>
    %51 = vector.shape_cast %50 : vector<1x8x128xf32> to vector<8x128xf32>
    %cst_36 = arith.constant dense<0.000000e+00> : vector<8x128xf32>
    %52 = tpu.matmul %49, %51, %cst_36 {dimension_numbers = #tpu.dot_dimension_numbers<[1], [0], [0], [1], [0, 0, 1, 1], [], []>} : vector<8x8xf32>, vector<8x128xf32>, vector<8x128xf32> -> vector<8x128xf32>
    %53 = arith.addf %15, %52 : vector<8x128xf32>
    %c1 = arith.constant 1 : index
    %c0_37 = arith.constant 0 : index
    %c0_38 = arith.constant 0 : index
    %54 = vector.load %arg3[%c1, %c0_37, %c0_38] : memref<4x8x128xf32, #tpu.memory_space<vmem>>, vector<1x8x128xf32>
    %55 = vector.shape_cast %54 : vector<1x8x128xf32> to vector<8x128xf32>
    %cst_39 = arith.constant dense<0.000000e+00> : vector<8x8xf32>
    %56 = tpu.matmul %14, %55, %cst_39 {dimension_numbers = #tpu.dot_dimension_numbers<[1], [1], [0], [0], [0, 0, 1, 0], [], []>} : vector<8x128xf32>, vector<8x128xf32>, vector<8x8xf32> -> vector<8x8xf32>
    %c1_40 = arith.constant 1 : index
    %c0_41 = arith.constant 0 : index
    %c0_42 = arith.constant 0 : index
    %57 = vector.load %arg4[%c1_40, %c0_41, %c0_42] : memref<4x1x8xf32, #tpu.memory_space<vmem>>, vector<1x1x8xf32>
    %58 = vector.shape_cast %57 : vector<1x1x8xf32> to vector<1x8xf32>
    %59 = vector.broadcast %58 : vector<1x8xf32> to vector<8x8xf32>
    %60 = arith.addf %56, %59 : vector<8x8xf32>
    %c1_43 = arith.constant 1 : index
    %c0_44 = arith.constant 0 : index
    %c0_45 = arith.constant 0 : index
    %61 = vector.load %arg5[%c1_43, %c0_44, %c0_45] : memref<4x8x128xf32, #tpu.memory_space<vmem>>, vector<1x8x128xf32>
    %62 = vector.shape_cast %61 : vector<1x8x128xf32> to vector<8x128xf32>
    %cst_46 = arith.constant dense<0.000000e+00> : vector<8x8xf32>
    %63 = tpu.matmul %14, %62, %cst_46 {dimension_numbers = #tpu.dot_dimension_numbers<[1], [1], [0], [0], [0, 0, 1, 0], [], []>} : vector<8x128xf32>, vector<8x128xf32>, vector<8x8xf32> -> vector<8x8xf32>
    %c1_47 = arith.constant 1 : index
    %c0_48 = arith.constant 0 : index
    %c0_49 = arith.constant 0 : index
    %64 = vector.load %arg6[%c1_47, %c0_48, %c0_49] : memref<4x1x8xf32, #tpu.memory_space<vmem>>, vector<1x1x8xf32>
    %65 = vector.shape_cast %64 : vector<1x1x8xf32> to vector<1x8xf32>
    %66 = vector.broadcast %65 : vector<1x8xf32> to vector<8x8xf32>
    %67 = arith.addf %63, %66 : vector<8x8xf32>
    %c1_50 = arith.constant 1 : index
    %c0_51 = arith.constant 0 : index
    %c0_52 = arith.constant 0 : index
    %68 = vector.load %arg7[%c1_50, %c0_51, %c0_52] : memref<4x8x128xf32, #tpu.memory_space<vmem>>, vector<1x8x128xf32>
    %69 = vector.shape_cast %68 : vector<1x8x128xf32> to vector<8x128xf32>
    %cst_53 = arith.constant dense<0.000000e+00> : vector<8x8xf32>
    %70 = tpu.matmul %14, %69, %cst_53 {dimension_numbers = #tpu.dot_dimension_numbers<[1], [1], [0], [0], [0, 0, 1, 0], [], []>} : vector<8x128xf32>, vector<8x128xf32>, vector<8x8xf32> -> vector<8x8xf32>
    %c1_54 = arith.constant 1 : index
    %c0_55 = arith.constant 0 : index
    %c0_56 = arith.constant 0 : index
    %71 = vector.load %arg8[%c1_54, %c0_55, %c0_56] : memref<4x1x8xf32, #tpu.memory_space<vmem>>, vector<1x1x8xf32>
    %72 = vector.shape_cast %71 : vector<1x1x8xf32> to vector<1x8xf32>
    %73 = vector.broadcast %72 : vector<1x8xf32> to vector<8x8xf32>
    %74 = arith.addf %70, %73 : vector<8x8xf32>
    %cst_57 = arith.constant dense<0.000000e+00> : vector<8x8xf32>
    %75 = tpu.matmul %60, %67, %cst_57 {dimension_numbers = #tpu.dot_dimension_numbers<[1], [1], [0], [0], [0, 0, 1, 0], [], []>} : vector<8x8xf32>, vector<8x8xf32>, vector<8x8xf32> -> vector<8x8xf32>
    %cst_58 = arith.constant 2.82842708 : f32
    %76 = vector.broadcast %cst_58 : f32 to vector<8x8xf32>
    %77 = arith.divf %75, %76 : vector<8x8xf32>
    %cst_59 = arith.constant dense<0xFF800000> : vector<8xf32>
    %78 = vector.multi_reduction <maximumf>, %77, %cst_59 [1] : vector<8x8xf32> to vector<8xf32>
    %79 = vector.shape_cast %78 : vector<8xf32> to vector<8x1xf32>
    %80 = vector.broadcast %79 : vector<8x1xf32> to vector<8x8xf32>
    %81 = arith.subf %77, %80 : vector<8x8xf32>
    %82 = math.exp %81 : vector<8x8xf32>
    %cst_60 = arith.constant dense<0.000000e+00> : vector<8xf32>
    %83 = vector.multi_reduction <add>, %82, %cst_60 [1] : vector<8x8xf32> to vector<8xf32>
    %84 = vector.shape_cast %83 : vector<8xf32> to vector<8x1xf32>
    %85 = vector.broadcast %84 : vector<8x1xf32> to vector<8x8xf32>
    %86 = arith.divf %82, %85 : vector<8x8xf32>
    %cst_61 = arith.constant dense<0.000000e+00> : vector<8x8xf32>
    %87 = tpu.matmul %86, %74, %cst_61 {dimension_numbers = #tpu.dot_dimension_numbers<[1], [0], [0], [1], [0, 0, 1, 1], [], []>} : vector<8x8xf32>, vector<8x8xf32>, vector<8x8xf32> -> vector<8x8xf32>
    %c1_62 = arith.constant 1 : index
    %c0_63 = arith.constant 0 : index
    %c0_64 = arith.constant 0 : index
    %88 = vector.load %arg9[%c1_62, %c0_63, %c0_64] : memref<4x8x128xf32, #tpu.memory_space<vmem>>, vector<1x8x128xf32>
    %89 = vector.shape_cast %88 : vector<1x8x128xf32> to vector<8x128xf32>
    %cst_65 = arith.constant dense<0.000000e+00> : vector<8x128xf32>
    %90 = tpu.matmul %87, %89, %cst_65 {dimension_numbers = #tpu.dot_dimension_numbers<[1], [0], [0], [1], [0, 0, 1, 1], [], []>} : vector<8x8xf32>, vector<8x128xf32>, vector<8x128xf32> -> vector<8x128xf32>
    %91 = arith.addf %53, %90 : vector<8x128xf32>
    %c2 = arith.constant 2 : index
    %c0_66 = arith.constant 0 : index
    %c0_67 = arith.constant 0 : index
    %92 = vector.load %arg3[%c2, %c0_66, %c0_67] : memref<4x8x128xf32, #tpu.memory_space<vmem>>, vector<1x8x128xf32>
    %93 = vector.shape_cast %92 : vector<1x8x128xf32> to vector<8x128xf32>
    %cst_68 = arith.constant dense<0.000000e+00> : vector<8x8xf32>
    %94 = tpu.matmul %14, %93, %cst_68 {dimension_numbers = #tpu.dot_dimension_numbers<[1], [1], [0], [0], [0, 0, 1, 0], [], []>} : vector<8x128xf32>, vector<8x128xf32>, vector<8x8xf32> -> vector<8x8xf32>
    %c2_69 = arith.constant 2 : index
    %c0_70 = arith.constant 0 : index
    %c0_71 = arith.constant 0 : index
    %95 = vector.load %arg4[%c2_69, %c0_70, %c0_71] : memref<4x1x8xf32, #tpu.memory_space<vmem>>, vector<1x1x8xf32>
    %96 = vector.shape_cast %95 : vector<1x1x8xf32> to vector<1x8xf32>
    %97 = vector.broadcast %96 : vector<1x8xf32> to vector<8x8xf32>
    %98 = arith.addf %94, %97 : vector<8x8xf32>
    %c2_72 = arith.constant 2 : index
    %c0_73 = arith.constant 0 : index
    %c0_74 = arith.constant 0 : index
    %99 = vector.load %arg5[%c2_72, %c0_73, %c0_74] : memref<4x8x128xf32, #tpu.memory_space<vmem>>, vector<1x8x128xf32>
    %100 = vector.shape_cast %99 : vector<1x8x128xf32> to vector<8x128xf32>
    %cst_75 = arith.constant dense<0.000000e+00> : vector<8x8xf32>
    %101 = tpu.matmul %14, %100, %cst_75 {dimension_numbers = #tpu.dot_dimension_numbers<[1], [1], [0], [0], [0, 0, 1, 0], [], []>} : vector<8x128xf32>, vector<8x128xf32>, vector<8x8xf32> -> vector<8x8xf32>
    %c2_76 = arith.constant 2 : index
    %c0_77 = arith.constant 0 : index
    %c0_78 = arith.constant 0 : index
    %102 = vector.load %arg6[%c2_76, %c0_77, %c0_78] : memref<4x1x8xf32, #tpu.memory_space<vmem>>, vector<1x1x8xf32>
    %103 = vector.shape_cast %102 : vector<1x1x8xf32> to vector<1x8xf32>
    %104 = vector.broadcast %103 : vector<1x8xf32> to vector<8x8xf32>
    %105 = arith.addf %101, %104 : vector<8x8xf32>
    %c2_79 = arith.constant 2 : index
    %c0_80 = arith.constant 0 : index
    %c0_81 = arith.constant 0 : index
    %106 = vector.load %arg7[%c2_79, %c0_80, %c0_81] : memref<4x8x128xf32, #tpu.memory_space<vmem>>, vector<1x8x128xf32>
    %107 = vector.shape_cast %106 : vector<1x8x128xf32> to vector<8x128xf32>
    %cst_82 = arith.constant dense<0.000000e+00> : vector<8x8xf32>
    %108 = tpu.matmul %14, %107, %cst_82 {dimension_numbers = #tpu.dot_dimension_numbers<[1], [1], [0], [0], [0, 0, 1, 0], [], []>} : vector<8x128xf32>, vector<8x128xf32>, vector<8x8xf32> -> vector<8x8xf32>
    %c2_83 = arith.constant 2 : index
    %c0_84 = arith.constant 0 : index
    %c0_85 = arith.constant 0 : index
    %109 = vector.load %arg8[%c2_83, %c0_84, %c0_85] : memref<4x1x8xf32, #tpu.memory_space<vmem>>, vector<1x1x8xf32>
    %110 = vector.shape_cast %109 : vector<1x1x8xf32> to vector<1x8xf32>
    %111 = vector.broadcast %110 : vector<1x8xf32> to vector<8x8xf32>
    %112 = arith.addf %108, %111 : vector<8x8xf32>
    %cst_86 = arith.constant dense<0.000000e+00> : vector<8x8xf32>
    %113 = tpu.matmul %98, %105, %cst_86 {dimension_numbers = #tpu.dot_dimension_numbers<[1], [1], [0], [0], [0, 0, 1, 0], [], []>} : vector<8x8xf32>, vector<8x8xf32>, vector<8x8xf32> -> vector<8x8xf32>
    %cst_87 = arith.constant 2.82842708 : f32
    %114 = vector.broadcast %cst_87 : f32 to vector<8x8xf32>
    %115 = arith.divf %113, %114 : vector<8x8xf32>
    %cst_88 = arith.constant dense<0xFF800000> : vector<8xf32>
    %116 = vector.multi_reduction <maximumf>, %115, %cst_88 [1] : vector<8x8xf32> to vector<8xf32>
    %117 = vector.shape_cast %116 : vector<8xf32> to vector<8x1xf32>
    %118 = vector.broadcast %117 : vector<8x1xf32> to vector<8x8xf32>
    %119 = arith.subf %115, %118 : vector<8x8xf32>
    %120 = math.exp %119 : vector<8x8xf32>
    %cst_89 = arith.constant dense<0.000000e+00> : vector<8xf32>
    %121 = vector.multi_reduction <add>, %120, %cst_89 [1] : vector<8x8xf32> to vector<8xf32>
    %122 = vector.shape_cast %121 : vector<8xf32> to vector<8x1xf32>
    %123 = vector.broadcast %122 : vector<8x1xf32> to vector<8x8xf32>
    %124 = arith.divf %120, %123 : vector<8x8xf32>
    %cst_90 = arith.constant dense<0.000000e+00> : vector<8x8xf32>
    %125 = tpu.matmul %124, %112, %cst_90 {dimension_numbers = #tpu.dot_dimension_numbers<[1], [0], [0], [1], [0, 0, 1, 1], [], []>} : vector<8x8xf32>, vector<8x8xf32>, vector<8x8xf32> -> vector<8x8xf32>
    %c2_91 = arith.constant 2 : index
    %c0_92 = arith.constant 0 : index
    %c0_93 = arith.constant 0 : index
    %126 = vector.load %arg9[%c2_91, %c0_92, %c0_93] : memref<4x8x128xf32, #tpu.memory_space<vmem>>, vector<1x8x128xf32>
    %127 = vector.shape_cast %126 : vector<1x8x128xf32> to vector<8x128xf32>
    %cst_94 = arith.constant dense<0.000000e+00> : vector<8x128xf32>
    %128 = tpu.matmul %125, %127, %cst_94 {dimension_numbers = #tpu.dot_dimension_numbers<[1], [0], [0], [1], [0, 0, 1, 1], [], []>} : vector<8x8xf32>, vector<8x128xf32>, vector<8x128xf32> -> vector<8x128xf32>
    %129 = arith.addf %91, %128 : vector<8x128xf32>
    %c3 = arith.constant 3 : index
    %c0_95 = arith.constant 0 : index
    %c0_96 = arith.constant 0 : index
    %130 = vector.load %arg3[%c3, %c0_95, %c0_96] : memref<4x8x128xf32, #tpu.memory_space<vmem>>, vector<1x8x128xf32>
    %131 = vector.shape_cast %130 : vector<1x8x128xf32> to vector<8x128xf32>
    %cst_97 = arith.constant dense<0.000000e+00> : vector<8x8xf32>
    %132 = tpu.matmul %14, %131, %cst_97 {dimension_numbers = #tpu.dot_dimension_numbers<[1], [1], [0], [0], [0, 0, 1, 0], [], []>} : vector<8x128xf32>, vector<8x128xf32>, vector<8x8xf32> -> vector<8x8xf32>
    %c3_98 = arith.constant 3 : index
    %c0_99 = arith.constant 0 : index
    %c0_100 = arith.constant 0 : index
    %133 = vector.load %arg4[%c3_98, %c0_99, %c0_100] : memref<4x1x8xf32, #tpu.memory_space<vmem>>, vector<1x1x8xf32>
    %134 = vector.shape_cast %133 : vector<1x1x8xf32> to vector<1x8xf32>
    %135 = vector.broadcast %134 : vector<1x8xf32> to vector<8x8xf32>
    %136 = arith.addf %132, %135 : vector<8x8xf32>
    %c3_101 = arith.constant 3 : index
    %c0_102 = arith.constant 0 : index
    %c0_103 = arith.constant 0 : index
    %137 = vector.load %arg5[%c3_101, %c0_102, %c0_103] : memref<4x8x128xf32, #tpu.memory_space<vmem>>, vector<1x8x128xf32>
    %138 = vector.shape_cast %137 : vector<1x8x128xf32> to vector<8x128xf32>
    %cst_104 = arith.constant dense<0.000000e+00> : vector<8x8xf32>
    %139 = tpu.matmul %14, %138, %cst_104 {dimension_numbers = #tpu.dot_dimension_numbers<[1], [1], [0], [0], [0, 0, 1, 0], [], []>} : vector<8x128xf32>, vector<8x128xf32>, vector<8x8xf32> -> vector<8x8xf32>
    %c3_105 = arith.constant 3 : index
    %c0_106 = arith.constant 0 : index
    %c0_107 = arith.constant 0 : index
    %140 = vector.load %arg6[%c3_105, %c0_106, %c0_107] : memref<4x1x8xf32, #tpu.memory_space<vmem>>, vector<1x1x8xf32>
    %141 = vector.shape_cast %140 : vector<1x1x8xf32> to vector<1x8xf32>
    %142 = vector.broadcast %141 : vector<1x8xf32> to vector<8x8xf32>
    %143 = arith.addf %139, %142 : vector<8x8xf32>
    %c3_108 = arith.constant 3 : index
    %c0_109 = arith.constant 0 : index
    %c0_110 = arith.constant 0 : index
    %144 = vector.load %arg7[%c3_108, %c0_109, %c0_110] : memref<4x8x128xf32, #tpu.memory_space<vmem>>, vector<1x8x128xf32>
    %145 = vector.shape_cast %144 : vector<1x8x128xf32> to vector<8x128xf32>
    %cst_111 = arith.constant dense<0.000000e+00> : vector<8x8xf32>
    %146 = tpu.matmul %14, %145, %cst_111 {dimension_numbers = #tpu.dot_dimension_numbers<[1], [1], [0], [0], [0, 0, 1, 0], [], []>} : vector<8x128xf32>, vector<8x128xf32>, vector<8x8xf32> -> vector<8x8xf32>
    %c3_112 = arith.constant 3 : index
    %c0_113 = arith.constant 0 : index
    %c0_114 = arith.constant 0 : index
    %147 = vector.load %arg8[%c3_112, %c0_113, %c0_114] : memref<4x1x8xf32, #tpu.memory_space<vmem>>, vector<1x1x8xf32>
    %148 = vector.shape_cast %147 : vector<1x1x8xf32> to vector<1x8xf32>
    %149 = vector.broadcast %148 : vector<1x8xf32> to vector<8x8xf32>
    %150 = arith.addf %146, %149 : vector<8x8xf32>
    %cst_115 = arith.constant dense<0.000000e+00> : vector<8x8xf32>
    %151 = tpu.matmul %136, %143, %cst_115 {dimension_numbers = #tpu.dot_dimension_numbers<[1], [1], [0], [0], [0, 0, 1, 0], [], []>} : vector<8x8xf32>, vector<8x8xf32>, vector<8x8xf32> -> vector<8x8xf32>
    %cst_116 = arith.constant 2.82842708 : f32
    %152 = vector.broadcast %cst_116 : f32 to vector<8x8xf32>
    %153 = arith.divf %151, %152 : vector<8x8xf32>
    %cst_117 = arith.constant dense<0xFF800000> : vector<8xf32>
    %154 = vector.multi_reduction <maximumf>, %153, %cst_117 [1] : vector<8x8xf32> to vector<8xf32>
    %155 = vector.shape_cast %154 : vector<8xf32> to vector<8x1xf32>
    %156 = vector.broadcast %155 : vector<8x1xf32> to vector<8x8xf32>
    %157 = arith.subf %153, %156 : vector<8x8xf32>
    %158 = math.exp %157 : vector<8x8xf32>
    %cst_118 = arith.constant dense<0.000000e+00> : vector<8xf32>
    %159 = vector.multi_reduction <add>, %158, %cst_118 [1] : vector<8x8xf32> to vector<8xf32>
    %160 = vector.shape_cast %159 : vector<8xf32> to vector<8x1xf32>
    %161 = vector.broadcast %160 : vector<8x1xf32> to vector<8x8xf32>
    %162 = arith.divf %158, %161 : vector<8x8xf32>
    %cst_119 = arith.constant dense<0.000000e+00> : vector<8x8xf32>
    %163 = tpu.matmul %162, %150, %cst_119 {dimension_numbers = #tpu.dot_dimension_numbers<[1], [0], [0], [1], [0, 0, 1, 1], [], []>} : vector<8x8xf32>, vector<8x8xf32>, vector<8x8xf32> -> vector<8x8xf32>
    %c3_120 = arith.constant 3 : index
    %c0_121 = arith.constant 0 : index
    %c0_122 = arith.constant 0 : index
    %164 = vector.load %arg9[%c3_120, %c0_121, %c0_122] : memref<4x8x128xf32, #tpu.memory_space<vmem>>, vector<1x8x128xf32>
    %165 = vector.shape_cast %164 : vector<1x8x128xf32> to vector<8x128xf32>
    %cst_123 = arith.constant dense<0.000000e+00> : vector<8x128xf32>
    %166 = tpu.matmul %163, %165, %cst_123 {dimension_numbers = #tpu.dot_dimension_numbers<[1], [0], [0], [1], [0, 0, 1, 1], [], []>} : vector<8x8xf32>, vector<8x128xf32>, vector<8x128xf32> -> vector<8x128xf32>
    %167 = arith.addf %129, %166 : vector<8x128xf32>
    %168 = arith.addf %1, %167 : vector<8x128xf32>
    %c0_124 = arith.constant 0 : index
    %c0_125 = arith.constant 0 : index
    %169 = vector.load %arg10[%c0_124, %c0_125] : memref<1x128xf32, #tpu.memory_space<vmem>>, vector<1x128xf32>
    %170 = vector.broadcast %169 : vector<1x128xf32> to vector<8x128xf32>
    %171 = arith.addf %168, %170 : vector<8x128xf32>
    %c0_126 = arith.constant 0 : index
    %c0_127 = arith.constant 0 : index
    %c0_128 = arith.constant 0 : index
    %172 = vector.load %arg11[%c0_126, %c0_127, %c0_128] : memref<1x8x128xf32, #tpu.memory_space<vmem>>, vector<1x8x128xf32>
    %173 = vector.shape_cast %172 : vector<1x8x128xf32> to vector<8x128xf32>
    %174 = vector.shape_cast %171 : vector<8x128xf32> to vector<1x8x128xf32>
    tpu.vector_store %arg11[%c0_126, %c0_127, %c0_128], %174 {strides = array<i32>} : memref<1x8x128xf32, #tpu.memory_space<vmem>>, vector<1x8x128xf32>,
    return
  }
  func.func @transform_0(%arg0: i32) -> (i32, i32, i32) {
    %c0_i32 = arith.constant 0 : i32
    %c0_i32_0 = arith.constant 0 : i32
    %c0_i32_1 = arith.constant 0 : i32
    return %arg0, %c0_i32, %c0_i32_0 : i32, i32, i32
  }
  func.func @transform_1(%arg0: i32) -> (i32, i32) {
    %c0_i32 = arith.constant 0 : i32
    %c0_i32_0 = arith.constant 0 : i32
    %c0_i32_1 = arith.constant 0 : i32
    return %c0_i32, %c0_i32_0 : i32, i32
  }
  func.func @transform_2(%arg0: i32) -> (i32, i32, i32) {
    %c0_i32 = arith.constant 0 : i32
    %c0_i32_0 = arith.constant 0 : i32
    %c0_i32_1 = arith.constant 0 : i32
    %c0_i32_2 = arith.constant 0 : i32
    return %c0_i32, %c0_i32_0, %c0_i32_1 : i32, i32, i32
  }
  func.func @transform_3(%arg0: i32) -> (i32, i32, i32) {
    %c0_i32 = arith.constant 0 : i32
    %c0_i32_0 = arith.constant 0 : i32
    %c0_i32_1 = arith.constant 0 : i32
    %c0_i32_2 = arith.constant 0 : i32
    return %c0_i32, %c0_i32_0, %c0_i32_1 : i32, i32, i32
  }
  func.func @transform_4(%arg0: i32) -> (i32, i32, i32) {
    %c0_i32 = arith.constant 0 : i32
    %c0_i32_0 = arith.constant 0 : i32
    %c0_i32_1 = arith.constant 0 : i32
    %c0_i32_2 = arith.constant 0 : i32
    return %c0_i32, %c0_i32_0, %c0_i32_1 : i32, i32, i32
  }
  func.func @transform_5(%arg0: i32) -> (i32, i32, i32) {
    %c0_i32 = arith.constant 0 : i32
    %c0_i32_0 = arith.constant 0 : i32
    %c0_i32_1 = arith.constant 0 : i32
    %c0_i32_2 = arith.constant 0 : i32
    return %c0_i32, %c0_i32_0, %c0_i32_1 : i32, i32, i32
  }
  func.func @transform_6(%arg0: i32) -> (i32, i32, i32) {
    %c0_i32 = arith.constant 0 : i32
    %c0_i32_0 = arith.constant 0 : i32
    %c0_i32_1 = arith.constant 0 : i32
    %c0_i32_2 = arith.constant 0 : i32
    return %c0_i32, %c0_i32_0, %c0_i32_1 : i32, i32, i32
  }
  func.func @transform_7(%arg0: i32) -> (i32, i32, i32) {
    %c0_i32 = arith.constant 0 : i32
    %c0_i32_0 = arith.constant 0 : i32
    %c0_i32_1 = arith.constant 0 : i32
    %c0_i32_2 = arith.constant 0 : i32
    return %c0_i32, %c0_i32_0, %c0_i32_1 : i32, i32, i32
  }
  func.func @transform_8(%arg0: i32) -> (i32, i32, i32) {
    %c0_i32 = arith.constant 0 : i32
    %c0_i32_0 = arith.constant 0 : i32
    %c0_i32_1 = arith.constant 0 : i32
    %c0_i32_2 = arith.constant 0 : i32
    return %c0_i32, %c0_i32_0, %c0_i32_1 : i32, i32, i32
  }
  func.func @transform_9(%arg0: i32) -> (i32, i32) {
    %c0_i32 = arith.constant 0 : i32
    %c0_i32_0 = arith.constant 0 : i32
    %c0_i32_1 = arith.constant 0 : i32
    return %c0_i32, %c0_i32_0 : i32, i32
  }
  func.func @transform_10(%arg0: i32) -> (i32, i32, i32) {
    %c0_i32 = arith.constant 0 : i32
    %c0_i32_0 = arith.constant 0 : i32
    %c0_i32_1 = arith.constant 0 : i32
    return %arg0, %c0_i32, %c0_i32_0 : i32, i32, i32
  }
}

</mosaic_0001>

<llo_original>
// kernel: mha_block_forward.3
$region0: #{mha_block_forward.3}
  #allocation0 [shape = 'u32[]', space=smem, size = 0x4, offset = 0x4, fixed_abs, tag = 'smem constant byte address 0x4 - core index']
  #allocation1 [shape = 'u32[72,128]{1,0:T(1,128)}', space=vmem, size = 0x9000, scoped, tag = 'internal scratch']
  #allocation2 [shape = 'f32[16,128]{1,0:T(8,128)}', space=vmem, size = 0x2000, scoped, tag = 'scratch operand']
  #allocation3 [shape = 'f32[16,128]{1,0:T(8,128)}', space=vmem, size = 0x2000, scoped, tag = 'scratch operand']
  %s0 = inlined_call_operand.vmem [shape: f32[16,128], index: 0, kind: input, shape index: {}]
  %s1 = inlined_call_operand.vmem [shape: f32[1,128], index: 1, kind: input, shape index: {}]
  %s2 = inlined_call_operand.vmem [shape: f32[128,128], index: 2, kind: input, shape index: {}]
  %s3 = inlined_call_operand.vmem [shape: f32[1,128], index: 3, kind: input, shape index: {}]
  %s4 = inlined_call_operand.vmem [shape: f32[128,128], index: 4, kind: input, shape index: {}]
  %s5 = inlined_call_operand.vmem [shape: f32[1,128], index: 5, kind: input, shape index: {}]
  %s6 = inlined_call_operand.vmem [shape: f32[16,128], index: 6, kind: output, shape index: {}]
  %s7 = sld [smem:[#allocation0]]
  $region42: #{mha_block_forward.3} parent=0
    _
  %s9 = ssub.s32 1, %s7
  %s10 = scalar_select 0, %s9, %s7
  // Predicated region
  $region2: #{mha_block_forward.3} parent=0 // pred_check
    _
  $region3: #{mha_block_forward.3} parent=0 // pred_check_branch
    %12 = sbr.rel (0) target = $region5
  $region4: #{mha_block_forward.3} parent=0 // pred_region
    _
  $region5: #{mha_block_forward.3} parent=0 // pred_fallthru
    _
  // Predicated region
  $region6: #{mha_block_forward.3} parent=0 // pred_check
    _
  $region7: #{mha_block_forward.3} parent=0 // pred_check_branch
    %14 = sbr.rel (0) target = $region9
  $region8: #{mha_block_forward.3} parent=0 // pred_region
    _
  $region9: #{mha_block_forward.3} parent=0 // pred_fallthru
    _
  // Predicated region
  $region10: #{mha_block_forward.3} parent=0 // pred_check
    _
  $region11: #{mha_block_forward.3} parent=0 // pred_check_branch
    %16 = sbr.rel (0) target = $region13
  $region12: #{mha_block_forward.3} parent=0 // pred_region
    _
  $region13: #{mha_block_forward.3} parent=0 // pred_fallthru
    _
  // Predicated region
  $region14: #{mha_block_forward.3} parent=0 // pred_check
    _
  $region15: #{mha_block_forward.3} parent=0 // pred_check_branch
    %18 = sbr.rel (0) target = $region17
  $region16: #{mha_block_forward.3} parent=0 // pred_region
    _
  $region17: #{mha_block_forward.3} parent=0 // pred_fallthru
    _
  // Predicated region
  $region18: #{mha_block_forward.3} parent=0 // pred_check
    _
  $region19: #{mha_block_forward.3} parent=0 // pred_check_branch
    %20 = sbr.rel (0) target = $region21
  $region20: #{mha_block_forward.3} parent=0 // pred_region
    _
  $region21: #{mha_block_forward.3} parent=0 // pred_fallthru
    _
  // Predicated region
  $region22: #{mha_block_forward.3} parent=0 // pred_check
    _
  $region23: #{mha_block_forward.3} parent=0 // pred_check_branch
    %22 = sbr.rel (0) target = $region25
  $region24: #{mha_block_forward.3} parent=0 // pred_region
    _
  $region25: #{mha_block_forward.3} parent=0 // pred_fallthru
    _
  %p23 = scmp.eq.s32.totalorder 0, 0
  // Predicated region
  $region26: #{mha_block_forward.3} parent=0 // pred_check
    %p24 = pneg %p23
  $region27: #{mha_block_forward.3} parent=0 // pred_check_branch
    %26 = sbr.rel (%p24) target = $region29
  $region28: #{mha_block_forward.3} parent=0 // pred_region
    %v27 = vld [vmem:[%s0] sm:$0xff]
    %v28 = vld [vmem:[%s0 + $0x8] sm:$0xff]
    %v29 = vmul.f32 %v27, %v27
    %v30 = vmul.f32 %v28, %v28
    %31 = vadd.xlane.f32.xlu0 %v29
    %v32 = vpop.xlane.xlu0 %31
    %33 = vadd.xlane.f32.xlu0 %v30
    %v34 = vpop.xlane.xlu0 %33
    %v35 = vrcp.pop 32.0
    %v36 = vmul.f32 32.0, %v35
    %v37 = vsub.f32 1.0, %v36
    %v38 = vmul.f32 %v35, %v37
    %v39 = vadd.f32 %v35, %v38
    %vm40 = vweird.f32 %v35
    %v41 = vsel %vm40, %v35, %v39
    %v42 = vmul.f32 %v32, %v41
    %v43 = vmul.f32 %v34, %v41
    %v44 = vadd.f32 %v42, 1e-06
    %v45 = vadd.f32 %v43, 1e-06
    %v46 = vrsqrt.pop %v44
    %v47 = vmul.f32 %v46, %v44
    %v48 = vmul.f32 %v47, %v46
    %v49 = vmul.f32 0.5, %v48
    %v50 = vsub.f32 1.5, %v49
    %v51 = vmul.f32 %v46, %v50
    %vm52 = vweird.f32 %v44
    %vm53 = vweird.f32 %v46
    %vm54 = vmor %vm52, %vm53
    %v55 = vsel %vm54, %v46, %v51
    %v56 = vrsqrt.pop %v45
    %v57 = vmul.f32 %v56, %v45
    %v58 = vmul.f32 %v57, %v56
    %v59 = vmul.f32 0.5, %v58
    %v60 = vsub.f32 1.5, %v59
    %v61 = vmul.f32 %v56, %v60
    %vm62 = vweird.f32 %v45
    %vm63 = vweird.f32 %v56
    %vm64 = vmor %vm62, %vm63
    %v65 = vsel %vm64, %v56, %v61
    %v66 = vmul.f32 %v27, %v55
    %v67 = vmul.f32 %v28, %v65
    %v68 = vld [vmem:[%s1] sm:$0x1]
    %v70 = vperm.slane %v68, 0
    %v72 = vmul.f32 %v66, %v70
    %v73 = vmul.f32 %v67, %v70
    %74 = vst [vmem:[#allocation2] sm:$0xff] %v72
    %75 = vst [vmem:[#allocation2 + $0x8] sm:$0xff] %v73
    %76 = vst [vmem:[#allocation3] sm:$0xff] 0.0
    %77 = vst [vmem:[#allocation3 + $0x8] sm:$0xff] 0.0
  $region29: #{mha_block_forward.3} parent=0 // pred_fallthru
    _
  %v78 = vld [vmem:[#allocation2] sm:$0xff]
  %v79 = vld [vmem:[#allocation2 + $0x8] sm:$0xff]
  %v80 = vld [vmem:[%s2] sm:$0xff]
  %v81 = vld [vmem:[%s2 + $0x8] sm:$0xff]
  %v82 = vld [vmem:[%s2 + $0x10] sm:$0xff]
  %v83 = vld [vmem:[%s2 + $0x18] sm:$0xff]
  %v84 = vld [vmem:[%s2 + $0x20] sm:$0xff]
  %v85 = vld [vmem:[%s2 + $0x28] sm:$0xff]
  %v86 = vld [vmem:[%s2 + $0x30] sm:$0xff]
  %v87 = vld [vmem:[%s2 + $0x38] sm:$0xff]
  %v88 = vld [vmem:[%s2 + $0x40] sm:$0xff]
  %v89 = vld [vmem:[%s2 + $0x48] sm:$0xff]
  %v90 = vld [vmem:[%s2 + $0x50] sm:$0xff]
  %v91 = vld [vmem:[%s2 + $0x58] sm:$0xff]
  %v92 = vld [vmem:[%s2 + $0x60] sm:$0xff]
  %v93 = vld [vmem:[%s2 + $0x68] sm:$0xff]
  %v94 = vld [vmem:[%s2 + $0x70] sm:$0xff]
  %v95 = vld [vmem:[%s2 + $0x78] sm:$0xff]
  %v96 = vld [vmem:[%s3] sm:$0x1]
  %v98 = vperm.slane %v96, 0
  %100 = vmatpush.msra.mxu0 %v95
  %101 = vmatpush.msra.mxu0 %v94
  %102 = vmatpush.msra.mxu0 %v93
  %103 = vmatpush.msra.mxu0 %v92
  %104 = vmatpush.msra.mxu0 %v91
  %105 = vmatpush.msra.mxu0 %v90
  %106 = vmatpush.msra.mxu0 %v89
  %107 = vmatpush.msra.mxu0 %v88
  %108 = vmatpush.msra.mxu0 %v87
  %109 = vmatpush.msra.mxu0 %v86
  %110 = vmatpush.msra.mxu0 %v85
  %111 = vmatpush.msra.mxu0 %v84
  %112 = vmatpush.msra.mxu0 %v83
  %113 = vmatpush.msra.mxu0 %v82
  %114 = vmatpush.msra.mxu0 %v81
  %115 = vmatpush.msra.mxu0 %v80
  %116 = vmatmul.f32.gmra.mxu0 %v78
  %v117 = vpop.f32.mrf.mxu0
  %v118 = vadd.f32 %v98, %v117
  %119 = vmatmul.f32.gmra.mxu0 %v79
  %v120 = vpop.f32.mrf.mxu0
  %v121 = vadd.f32 %v98, %v120
  %122 = vdwg.mxu0
  %v123 = vmax.f32 %v118, 0.0
  %v124 = vmax.f32 %v121, 0.0
  %v125 = vld [vmem:[#allocation3] sm:$0xff]
  %v126 = vld [vmem:[#allocation3 + $0x8] sm:$0xff]
  %v127 = vld [vmem:[%s4] sm:$0xff]
  %v128 = vld [vmem:[%s4 + $0x8] sm:$0xff]
  %v129 = vld [vmem:[%s4 + $0x10] sm:$0xff]
  %v130 = vld [vmem:[%s4 + $0x18] sm:$0xff]
  %v131 = vld [vmem:[%s4 + $0x20] sm:$0xff]
  %v132 = vld [vmem:[%s4 + $0x28] sm:$0xff]
  %v133 = vld [vmem:[%s4 + $0x30] sm:$0xff]
  %v134 = vld [vmem:[%s4 + $0x38] sm:$0xff]
  %v135 = vld [vmem:[%s4 + $0x40] sm:$0xff]
  %v136 = vld [vmem:[%s4 + $0x48] sm:$0xff]
  %v137 = vld [vmem:[%s4 + $0x50] sm:$0xff]
  %v138 = vld [vmem:[%s4 + $0x58] sm:$0xff]
  %v139 = vld [vmem:[%s4 + $0x60] sm:$0xff]
  %v140 = vld [vmem:[%s4 + $0x68] sm:$0xff]
  %v141 = vld [vmem:[%s4 + $0x70] sm:$0xff]
  %v142 = vld [vmem:[%s4 + $0x78] sm:$0xff]
  %143 = vmatpush.msra.mxu0 %v142
  %144 = vmatpush.msra.mxu0 %v141
  %145 = vmatpush.msra.mxu0 %v140
  %146 = vmatpush.msra.mxu0 %v139
  %147 = vmatpush.msra.mxu0 %v138
  %148 = vmatpush.msra.mxu0 %v137
  %149 = vmatpush.msra.mxu0 %v136
  %150 = vmatpush.msra.mxu0 %v135
  %151 = vmatpush.msra.mxu0 %v134
  %152 = vmatpush.msra.mxu0 %v133
  %153 = vmatpush.msra.mxu0 %v132
  %154 = vmatpush.msra.mxu0 %v131
  %155 = vmatpush.msra.mxu0 %v130
  %156 = vmatpush.msra.mxu0 %v129
  %157 = vmatpush.msra.mxu0 %v128
  %158 = vmatpush.msra.mxu0 %v127
  %159 = vmatmul.f32.gmra.mxu0 %v123
  %v160 = vpop.f32.mrf.mxu0
  %v161 = vadd.f32 0.0, %v160
  %162 = vmatmul.f32.gmra.mxu0 %v124
  %v163 = vpop.f32.mrf.mxu0
  %v164 = vadd.f32 0.0, %v163
  %165 = vdwg.mxu0
  %v166 = vadd.f32 %v125, %v161
  %v167 = vadd.f32 %v126, %v164
  %168 = vst [vmem:[#allocation3] sm:$0xff] %v166
  %169 = vst [vmem:[#allocation3 + $0x8] sm:$0xff] %v167
  // Predicated region
  $region30: #{mha_block_forward.3} parent=0 // pred_check
    %p170 = pneg %p23
  $region31: #{mha_block_forward.3} parent=0 // pred_check_branch
    %172 = sbr.rel (%p170) target = $region33
  $region32: #{mha_block_forward.3} parent=0 // pred_region
    %v173 = vld [vmem:[%s0] sm:$0xff]
    %v174 = vld [vmem:[%s0 + $0x8] sm:$0xff]
    %v175 = vld [vmem:[#allocation3] sm:$0xff]
    %v176 = vld [vmem:[#allocation3 + $0x8] sm:$0xff]
    %v177 = vadd.f32 %v173, %v175
    %v178 = vadd.f32 %v174, %v176
    %v179 = vld [vmem:[%s5] sm:$0x1]
    %v181 = vperm.slane %v179, 0
    %v183 = vadd.f32 %v177, %v181
    %v184 = vadd.f32 %v178, %v181
    %185 = vst [vmem:[%s6] sm:$0xff] %v183
    %186 = vst [vmem:[%s6 + $0x8] sm:$0xff] %v184
  $region33: #{mha_block_forward.3} parent=0 // pred_fallthru
    _
  // Predicated region
  $region34: #{mha_block_forward.3} parent=0 // pred_check
    _
  $region35: #{mha_block_forward.3} parent=0 // pred_check_branch
    %188 = sbr.rel (0) target = $region37
  $region36: #{mha_block_forward.3} parent=0 // pred_region
    _
  $region37: #{mha_block_forward.3} parent=0 // pred_fallthru
    _
  // Predicated region
  $region38: #{mha_block_forward.3} parent=0 // pred_check
    _
  $region39: #{mha_block_forward.3} parent=0 // pred_check_branch
    %190 = sbr.rel (0) target = $region41
  $region40: #{mha_block_forward.3} parent=0 // pred_region
    _
  $region41: #{mha_block_forward.3} parent=0 // pred_fallthru
    _

// kernel: mha_block_forward.2
$region0: #{mha_block_forward.2}
  #allocation0 [shape = 'u32[]', space=smem, size = 0x4, offset = 0x4, fixed_abs, tag = 'smem constant byte address 0x4 - core index']
  #allocation1 [shape = 'u32[72,128]{1,0:T(1,128)}', space=vmem, size = 0x9000, scoped, tag = 'internal scratch']
  %s0 = inlined_call_operand.vmem [shape: f32[2,8,128], index: 0, kind: input, shape index: {}]
  %s1 = inlined_call_operand.vmem [shape: f32[1,128], index: 1, kind: input, shape index: {}]
  %s2 = inlined_call_operand.vmem [shape: f32[4,8,128], index: 2, kind: input, shape index: {}]
  %s3 = inlined_call_operand.vmem [shape: f32[4,1,8], index: 3, kind: input, shape index: {}]
  %s4 = inlined_call_operand.vmem [shape: f32[4,8,128], index: 4, kind: input, shape index: {}]
  %s5 = inlined_call_operand.vmem [shape: f32[4,1,8], index: 5, kind: input, shape index: {}]
  %s6 = inlined_call_operand.vmem [shape: f32[4,8,128], index: 6, kind: input, shape index: {}]
  %s7 = inlined_call_operand.vmem [shape: f32[4,1,8], index: 7, kind: input, shape index: {}]
  %s8 = inlined_call_operand.vmem [shape: f32[4,8,128], index: 8, kind: input, shape index: {}]
  %s9 = inlined_call_operand.vmem [shape: f32[1,128], index: 9, kind: input, shape index: {}]
  %s10 = inlined_call_operand.vmem [shape: f32[2,8,128], index: 10, kind: output, shape index: {}]
  %s11 = sld [smem:[#allocation0]]
  $region73: #{mha_block_forward.2} parent=0
    _
  %s13 = ssub.s32 1, %s11
  %s14 = scalar_select 0, %s13, %s11
  loop: start=0, step=1, limit=4
  $region2: #{mha_block_forward.2} parent=0 // loop_pre_header
    _
  $region3: #{mha_block_forward.2} parent=0 // loop_header
    %s16 = sphi 0, %s20
    %p17 = scmp.ge.s32.totalorder %s16, 4
    %s26 = sphi 0, %s28
    %s29 = sphi 0, %s26
    %s30 = sphi 0, %s29
    %s46 = sphi 0, %s30
    %s50 = sphi 0, %s50
    %s52 = sphi 0, %s50
    %s53 = sphi 0, %s52
    %s67 = sphi 0, %s53
    %s71 = sphi 0, %s71
    %s73 = sphi 0, %s71
    %s74 = sphi 0, %s73
    %s88 = sphi 0, %s74
    %s92 = sphi 0, %s92
    %s94 = sphi 0, %s92
    %s95 = sphi 0, %s94
    %s109 = sphi 0, %s95
    %s113 = sphi 0, %s113
    %s115 = sphi 0, %s113
    %s116 = sphi 0, %s115
    %s130 = sphi 0, %s116
    %s134 = sphi 0, %s134
    %s136 = sphi 0, %s134
    %s137 = sphi 0, %s136
    %s151 = sphi 0, %s137
    %s155 = sphi 0, %s155
    %s157 = sphi 0, %s155
    %s158 = sphi 0, %s157
    %s172 = sphi 0, %s158
    %s176 = sphi 0, %s176
    %s178 = sphi 0, %s176
    %s179 = sphi 0, %s178
    %s193 = sphi 0, %s179
    %s197 = sphi 0, %s197
    %s199 = sphi 0, %s197
    %s200 = sphi 0, %s199
    %s214 = sphi 0, %s200
    %s218 = sphi 0, %s218
    %s220 = sphi 0, %s218
    %s221 = sphi 0, %s220
    %s235 = sphi 0, %s221
    %s241 = sphi 0, %s243
    %s244 = sphi 0, %s241
    %s245 = sphi 0, %s244
    %s261 = sphi 0, %s245
  $region4: #{mha_block_forward.2} parent=0 // loop_header_branch
    %19 = sbr.rel (%p17) target = $region8
  $region5: #{mha_block_forward.2} parent=0 // loop_body
    %s21 = ssub.s32 %s16, 1
    %s22 = ssub.s32 %s16, 2
    %s23 = sadd.s32 %s16, 1
    %s24 = ssub.s32 %s16, %s23
    %p25 = scmp.eq.s32.totalorder %s24, 0
    %s27 = sadd.s32 %s26, 1
    %s28 = scalar_select %p25, %s26, %s27
    %p31 = pneg %p25
    %p32 = scmp.eq.s32.totalorder %s16, 1
    %p33 = por %p31, %p32
    %p34 = scmp.ne.s32.totalorder %s26, %s29
    %p35 = scmp.eq.s32.totalorder %s16, 0
    %p36 = por %p34, %p35
    %p37 = scmp.ne.s32.totalorder %s26, %s29
    %p38 = scmp.eq.s32.totalorder %s21, 1
    %p39 = por %p37, %p38
    %p40 = scmp.ne.s32.totalorder %s29, %s30
    %p41 = scmp.eq.s32.totalorder %s21, 0
    %p42 = por %p40, %p41
    %p43 = scmp.ne.s32.totalorder %s29, %s30
    %p44 = scmp.eq.s32.totalorder %s22, 1
    %p45 = por %p43, %p44
    %p47 = scmp.ne.s32.totalorder %s30, %s46
    %p48 = scmp.eq.s32.totalorder %s22, 0
    %p49 = por %p47, %p48
    %s51 = sadd.s32 %s50, 1
    %p54 = scmp.eq.s32.totalorder %s16, 1
    %p55 = scmp.ne.s32.totalorder %s50, %s52
    %p56 = scmp.eq.s32.totalorder %s16, 0
    %p57 = por %p55, %p56
    %p58 = scmp.ne.s32.totalorder %s50, %s52
    %p59 = scmp.eq.s32.totalorder %s21, 1
    %p60 = por %p58, %p59
    %p61 = scmp.ne.s32.totalorder %s52, %s53
    %p62 = scmp.eq.s32.totalorder %s21, 0
    %p63 = por %p61, %p62
    %p64 = scmp.ne.s32.totalorder %s52, %s53
    %p65 = scmp.eq.s32.totalorder %s22, 1
    %p66 = por %p64, %p65
    %p68 = scmp.ne.s32.totalorder %s53, %s67
    %p69 = scmp.eq.s32.totalorder %s22, 0
    %p70 = por %p68, %p69
    %s72 = sadd.s32 %s71, 1
    %p75 = scmp.eq.s32.totalorder %s16, 1
    %p76 = scmp.ne.s32.totalorder %s71, %s73
    %p77 = scmp.eq.s32.totalorder %s16, 0
    %p78 = por %p76, %p77
    %p79 = scmp.ne.s32.totalorder %s71, %s73
    %p80 = scmp.eq.s32.totalorder %s21, 1
    %p81 = por %p79, %p80
    %p82 = scmp.ne.s32.totalorder %s73, %s74
    %p83 = scmp.eq.s32.totalorder %s21, 0
    %p84 = por %p82, %p83
    %p85 = scmp.ne.s32.totalorder %s73, %s74
    %p86 = scmp.eq.s32.totalorder %s22, 1
    %p87 = por %p85, %p86
    %p89 = scmp.ne.s32.totalorder %s74, %s88
    %p90 = scmp.eq.s32.totalorder %s22, 0
    %p91 = por %p89, %p90
    %s93 = sadd.s32 %s92, 1
    %p96 = scmp.eq.s32.totalorder %s16, 1
    %p97 = scmp.ne.s32.totalorder %s92, %s94
    %p98 = scmp.eq.s32.totalorder %s16, 0
    %p99 = por %p97, %p98
    %p100 = scmp.ne.s32.totalorder %s92, %s94
    %p101 = scmp.eq.s32.totalorder %s21, 1
    %p102 = por %p100, %p101
    %p103 = scmp.ne.s32.totalorder %s94, %s95
    %p104 = scmp.eq.s32.totalorder %s21, 0
    %p105 = por %p103, %p104
    %p106 = scmp.ne.s32.totalorder %s94, %s95
    %p107 = scmp.eq.s32.totalorder %s22, 1
    %p108 = por %p106, %p107
    %p110 = scmp.ne.s32.totalorder %s95, %s109
    %p111 = scmp.eq.s32.totalorder %s22, 0
    %p112 = por %p110, %p111
    %s114 = sadd.s32 %s113, 1
    %p117 = scmp.eq.s32.totalorder %s16, 1
    %p118 = scmp.ne.s32.totalorder %s113, %s115
    %p119 = scmp.eq.s32.totalorder %s16, 0
    %p120 = por %p118, %p119
    %p121 = scmp.ne.s32.totalorder %s113, %s115
    %p122 = scmp.eq.s32.totalorder %s21, 1
    %p123 = por %p121, %p122
    %p124 = scmp.ne.s32.totalorder %s115, %s116
    %p125 = scmp.eq.s32.totalorder %s21, 0
    %p126 = por %p124, %p125
    %p127 = scmp.ne.s32.totalorder %s115, %s116
    %p128 = scmp.eq.s32.totalorder %s22, 1
    %p129 = por %p127, %p128
    %p131 = scmp.ne.s32.totalorder %s116, %s130
    %p132 = scmp.eq.s32.totalorder %s22, 0
    %p133 = por %p131, %p132
    %s135 = sadd.s32 %s134, 1
    %p138 = scmp.eq.s32.totalorder %s16, 1
    %p139 = scmp.ne.s32.totalorder %s134, %s136
    %p140 = scmp.eq.s32.totalorder %s16, 0
    %p141 = por %p139, %p140
    %p142 = scmp.ne.s32.totalorder %s134, %s136
    %p143 = scmp.eq.s32.totalorder %s21, 1
    %p144 = por %p142, %p143
    %p145 = scmp.ne.s32.totalorder %s136, %s137
    %p146 = scmp.eq.s32.totalorder %s21, 0
    %p147 = por %p145, %p146
    %p148 = scmp.ne.s32.totalorder %s136, %s137
    %p149 = scmp.eq.s32.totalorder %s22, 1
    %p150 = por %p148, %p149
    %p152 = scmp.ne.s32.totalorder %s137, %s151
    %p153 = scmp.eq.s32.totalorder %s22, 0
    %p154 = por %p152, %p153
    %s156 = sadd.s32 %s155, 1
    %p159 = scmp.eq.s32.totalorder %s16, 1
    %p160 = scmp.ne.s32.totalorder %s155, %s157
    %p161 = scmp.eq.s32.totalorder %s16, 0
    %p162 = por %p160, %p161
    %p163 = scmp.ne.s32.totalorder %s155, %s157
    %p164 = scmp.eq.s32.totalorder %s21, 1
    %p165 = por %p163, %p164
    %p166 = scmp.ne.s32.totalorder %s157, %s158
    %p167 = scmp.eq.s32.totalorder %s21, 0
    %p168 = por %p166, %p167
    %p169 = scmp.ne.s32.totalorder %s157, %s158
    %p170 = scmp.eq.s32.totalorder %s22, 1
    %p171 = por %p169, %p170
    %p173 = scmp.ne.s32.totalorder %s158, %s172
    %p174 = scmp.eq.s32.totalorder %s22, 0
    %p175 = por %p173, %p174
    %s177 = sadd.s32 %s176, 1
    %p180 = scmp.eq.s32.totalorder %s16, 1
    %p181 = scmp.ne.s32.totalorder %s176, %s178
    %p182 = scmp.eq.s32.totalorder %s16, 0
    %p183 = por %p181, %p182
    %p184 = scmp.ne.s32.totalorder %s176, %s178
    %p185 = scmp.eq.s32.totalorder %s21, 1
    %p186 = por %p184, %p185
    %p187 = scmp.ne.s32.totalorder %s178, %s179
    %p188 = scmp.eq.s32.totalorder %s21, 0
    %p189 = por %p187, %p188
    %p190 = scmp.ne.s32.totalorder %s178, %s179
    %p191 = scmp.eq.s32.totalorder %s22, 1
    %p192 = por %p190, %p191
    %p194 = scmp.ne.s32.totalorder %s179, %s193
    %p195 = scmp.eq.s32.totalorder %s22, 0
    %p196 = por %p194, %p195
    %s198 = sadd.s32 %s197, 1
    %p201 = scmp.eq.s32.totalorder %s16, 1
    %p202 = scmp.ne.s32.totalorder %s197, %s199
    %p203 = scmp.eq.s32.totalorder %s16, 0
    %p204 = por %p202, %p203
    %p205 = scmp.ne.s32.totalorder %s197, %s199
    %p206 = scmp.eq.s32.totalorder %s21, 1
    %p207 = por %p205, %p206
    %p208 = scmp.ne.s32.totalorder %s199, %s200
    %p209 = scmp.eq.s32.totalorder %s21, 0
    %p210 = por %p208, %p209
    %p211 = scmp.ne.s32.totalorder %s199, %s200
    %p212 = scmp.eq.s32.totalorder %s22, 1
    %p213 = por %p211, %p212
    %p215 = scmp.ne.s32.totalorder %s200, %s214
    %p216 = scmp.eq.s32.totalorder %s22, 0
    %p217 = por %p215, %p216
    %s219 = sadd.s32 %s218, 1
    %p222 = scmp.eq.s32.totalorder %s16, 1
    %p223 = scmp.ne.s32.totalorder %s218, %s220
    %p224 = scmp.eq.s32.totalorder %s16, 0
    %p225 = por %p223, %p224
    %p226 = scmp.ne.s32.totalorder %s218, %s220
    %p227 = scmp.eq.s32.totalorder %s21, 1
    %p228 = por %p226, %p227
    %p229 = scmp.ne.s32.totalorder %s220, %s221
    %p230 = scmp.eq.s32.totalorder %s21, 0
    %p231 = por %p229, %p230
    %p232 = scmp.ne.s32.totalorder %s220, %s221
    %p233 = scmp.eq.s32.totalorder %s22, 1
    %p234 = por %p232, %p233
    %p236 = scmp.ne.s32.totalorder %s221, %s235
    %p237 = scmp.eq.s32.totalorder %s22, 0
    %p238 = por %p236, %p237
    %s239 = ssub.s32 %s16, %s23
    %p240 = scmp.eq.s32.totalorder %s239, 0
    %s242 = sadd.s32 %s241, 1
    %s243 = scalar_select %p240, %s241, %s242
    %p246 = pneg %p240
    %p247 = scmp.eq.s32.totalorder %s16, 1
    %p248 = por %p246, %p247
    %p249 = scmp.ne.s32.totalorder %s241, %s244
    %p250 = scmp.eq.s32.totalorder %s16, 0
    %p251 = por %p249, %p250
    %p252 = scmp.ne.s32.totalorder %s241, %s244
    %p253 = scmp.eq.s32.totalorder %s21, 1
    %p254 = por %p252, %p253
    %p255 = scmp.ne.s32.totalorder %s244, %s245
    %p256 = scmp.eq.s32.totalorder %s21, 0
    %p257 = por %p255, %p256
    %p258 = scmp.ne.s32.totalorder %s244, %s245
    %p259 = scmp.eq.s32.totalorder %s22, 1
    %p260 = por %p258, %p259
    %p262 = scmp.ne.s32.totalorder %s245, %s261
    %p263 = scmp.eq.s32.totalorder %s22, 0
    %p264 = por %p262, %p263
    %p265 = scmp.le.s32.totalorder 1, %s16
    %p266 = scmp.lt.s32.totalorder %s16, 3
    %p267 = pnand %p265, %p266
    %p268 = pneg %p267
    // Predicated region
    $region9: #{mha_block_forward.2} parent=5 // pred_check
      _
    $region10: #{mha_block_forward.2} parent=5 // pred_check_branch
      %270 = sbr.rel (%p267) target = $region12
    $region11: #{mha_block_forward.2} parent=5 // pred_region
      %s271 = ssub.s32 %s16, 1
      // Predicated region
      $region13: #{mha_block_forward.2} parent=11 // pred_check
        %p272 = pneg %p63
      $region14: #{mha_block_forward.2} parent=11 // pred_check_branch
        %274 = sbr.rel (%p272) target = $region16
      $region15: #{mha_block_forward.2} parent=11 // pred_region
        _
      $region16: #{mha_block_forward.2} parent=11 // pred_fallthru
        _
      // Predicated region
      $region17: #{mha_block_forward.2} parent=11 // pred_check
        %p275 = pneg %p84
      $region18: #{mha_block_forward.2} parent=11 // pred_check_branch
        %277 = sbr.rel (%p275) target = $region20
      $region19: #{mha_block_forward.2} parent=11 // pred_region
        _
      $region20: #{mha_block_forward.2} parent=11 // pred_fallthru
        _
      // Predicated region
      $region21: #{mha_block_forward.2} parent=11 // pred_check
        %p278 = pneg %p105
      $region22: #{mha_block_forward.2} parent=11 // pred_check_branch
        %280 = sbr.rel (%p278) target = $region24
      $region23: #{mha_block_forward.2} parent=11 // pred_region
        _
      $region24: #{mha_block_forward.2} parent=11 // pred_fallthru
        _
      // Predicated region
      $region25: #{mha_block_forward.2} parent=11 // pred_check
        %p281 = pneg %p126
      $region26: #{mha_block_forward.2} parent=11 // pred_check_branch
        %283 = sbr.rel (%p281) target = $region28
      $region27: #{mha_block_forward.2} parent=11 // pred_region
        _
      $region28: #{mha_block_forward.2} parent=11 // pred_fallthru
        _
      // Predicated region
      $region29: #{mha_block_forward.2} parent=11 // pred_check
        %p284 = pneg %p147
      $region30: #{mha_block_forward.2} parent=11 // pred_check_branch
        %286 = sbr.rel (%p284) target = $region32
      $region31: #{mha_block_forward.2} parent=11 // pred_region
        _
      $region32: #{mha_block_forward.2} parent=11 // pred_fallthru
        _
      // Predicated region
      $region33: #{mha_block_forward.2} parent=11 // pred_check
        %p287 = pneg %p168
      $region34: #{mha_block_forward.2} parent=11 // pred_check_branch
        %289 = sbr.rel (%p287) target = $region36
      $region35: #{mha_block_forward.2} parent=11 // pred_region
        _
      $region36: #{mha_block_forward.2} parent=11 // pred_fallthru
        _
      // Predicated region
      $region37: #{mha_block_forward.2} parent=11 // pred_check
        %p290 = pneg %p189
      $region38: #{mha_block_forward.2} parent=11 // pred_check_branch
        %292 = sbr.rel (%p290) target = $region40
      $region39: #{mha_block_forward.2} parent=11 // pred_region
        _
      $region40: #{mha_block_forward.2} parent=11 // pred_fallthru
        _
      // Predicated region
      $region41: #{mha_block_forward.2} parent=11 // pred_check
        %p293 = pneg %p210
      $region42: #{mha_block_forward.2} parent=11 // pred_check_branch
        %295 = sbr.rel (%p293) target = $region44
      $region43: #{mha_block_forward.2} parent=11 // pred_region
        _
      $region44: #{mha_block_forward.2} parent=11 // pred_fallthru
        _
      // Predicated region
      $region45: #{mha_block_forward.2} parent=11 // pred_check
        %p296 = pneg %p231
      $region46: #{mha_block_forward.2} parent=11 // pred_check_branch
        %298 = sbr.rel (%p296) target = $region48
      $region47: #{mha_block_forward.2} parent=11 // pred_region
        _
      $region48: #{mha_block_forward.2} parent=11 // pred_fallthru
        _
    $region12: #{mha_block_forward.2} parent=5 // pred_fallthru
      _
    %p299 = scmp.lt.s32.totalorder %s16, 2
    // Predicated region
    $region49: #{mha_block_forward.2} parent=5 // pred_check
      %p300 = pneg %p299
    $region50: #{mha_block_forward.2} parent=5 // pred_check_branch
      %302 = sbr.rel (%p300) target = $region52
    $region51: #{mha_block_forward.2} parent=5 // pred_region
      // Predicated region
      $region53: #{mha_block_forward.2} parent=51 // pred_check
        %p303 = pneg %p36
      $region54: #{mha_block_forward.2} parent=51 // pred_check_branch
        %305 = sbr.rel (%p303) target = $region56
      $region55: #{mha_block_forward.2} parent=51 // pred_region
        %p306 = scmp.lt.s32.totalorder %s16, 1
        %s307 = scalar_select %p306, %s16, 1
        %s308 = smul.addr %s307, 8
        %s309 = scalar_lea.vmem %s0, %s308
      $region56: #{mha_block_forward.2} parent=51 // pred_fallthru
        _
    $region52: #{mha_block_forward.2} parent=5 // pred_fallthru
      _
    %p310 = scmp.le.s32.totalorder 1, %s16
    %p311 = scmp.lt.s32.totalorder %s16, 3
    %p312 = pnand %p310, %p311
    %p313 = pneg %p312
    // Predicated region
    $region57: #{mha_block_forward.2} parent=5 // pred_check
      _
    $region58: #{mha_block_forward.2} parent=5 // pred_check_branch
      %315 = sbr.rel (%p312) target = $region60
    $region59: #{mha_block_forward.2} parent=5 // pred_region
      %s316 = ssub.s32 %s16, 1
      %p317 = scmp.lt.s32.totalorder %s21, 1
      %s318 = scalar_select %p317, %s21, 1
      %s319 = smul.addr %s318, 8
      %s320 = scalar_lea.vmem %s0, %s319
      %p321 = pneg %p42
      %p322 = pneg %p39
      %p323 = pneg %p63
      %p324 = pneg %p60
      %p325 = pneg %p84
      %p326 = pneg %p81
      %p327 = pneg %p105
      %p328 = pneg %p102
      %p329 = pneg %p126
      %p330 = pneg %p123
      %p331 = pneg %p147
      %p332 = pneg %p144
      %p333 = pneg %p168
      %p334 = pneg %p165
      %p335 = pneg %p189
      %p336 = pneg %p186
      %p337 = pneg %p210
      %p338 = pneg %p207
      %p339 = pneg %p231
      %p340 = pneg %p228
      %p341 = pneg %p257
      %p342 = pneg %p254
      %p343 = scmp.lt.s32.totalorder %s21, 1
      %s344 = scalar_select %p343, %s21, 1
      %s345 = smul.addr %s344, 8
      %s346 = scalar_lea.vmem %s10, %s345
      %p347 = scmp.lt.s32.totalorder %s21, 1
      %s348 = scalar_select %p347, %s21, 1
      %s349 = smul.addr %s348, 8
      %s350 = scalar_lea.vmem %s0, %s349
      %p351 = scmp.lt.s32.totalorder %s21, 1
      %s352 = scalar_select %p351, %s21, 1
      %s353 = smul.addr %s352, 8
      %s354 = scalar_lea.vmem %s10, %s353
      %v355 = vld [vmem:[%s350] sm:$0xff]
      %v356 = vmul.f32 %v355, %v355
      %357 = vadd.xlane.f32.xlu0 %v356
      %v358 = vpop.xlane.xlu0 %357
      %v359 = vrcp.pop 32.0
      %v360 = vmul.f32 32.0, %v359
      %v361 = vsub.f32 1.0, %v360
      %v362 = vmul.f32 %v359, %v361
      %v363 = vadd.f32 %v359, %v362
      %vm364 = vweird.f32 %v359
      %v365 = vsel %vm364, %v359, %v363
      %v366 = vmul.f32 %v358, %v365
      %v367 = vadd.f32 %v366, 1e-06
      %v368 = vrsqrt.pop %v367
      %v369 = vmul.f32 %v368, %v367
      %v370 = vmul.f32 %v369, %v368
      %v371 = vmul.f32 0.5, %v370
      %v372 = vsub.f32 1.5, %v371
      %v373 = vmul.f32 %v368, %v372
      %vm374 = vweird.f32 %v367
      %vm375 = vweird.f32 %v368
      %vm376 = vmor %vm374, %vm375
      %v377 = vsel %vm376, %v368, %v373
      %v378 = vmul.f32 %v355, %v377
      %v379 = vld [vmem:[%s1] sm:$0x1]
      %v381 = vperm.slane %v379, 0
      %v383 = vmul.f32 %v378, %v381
      %v384 = vld [vmem:[%s2] sm:$0xff]
      %v385 = vld [vmem:[%s3] sm:$0x1]
      %v387 = vperm.slane %v385, 0
      %389 = vmatpush.xpose.msra.mxu0 0.0
      %390 = vmatpush.xpose.msra.mxu0 0.0
      %391 = vmatpush.xpose.msra.mxu0 0.0
      %392 = vmatpush.xpose.msra.mxu0 0.0
      %393 = vmatpush.xpose.msra.mxu0 0.0
      %394 = vmatpush.xpose.msra.mxu0 0.0
      %395 = vmatpush.xpose.msra.mxu0 0.0
      %396 = vmatpush.xpose.msra.mxu0 0.0
      %397 = vmatpush.xpose.msra.mxu0 0.0
      %398 = vmatpush.xpose.msra.mxu0 0.0
      %399 = vmatpush.xpose.msra.mxu0 0.0
      %400 = vmatpush.xpose.msra.mxu0 0.0
      %401 = vmatpush.xpose.msra.mxu0 0.0
      %402 = vmatpush.xpose.msra.mxu0 0.0
      %403 = vmatpush.xpose.msra.mxu0 0.0
      %404 = vmatpush.xpose.msra.mxu0 %v384
      %405 = vmatmul.f32.gmra.mxu0 %v383
      %v406 = vpop.f32.mrf.mxu0
      %v407 = vadd.f32 %v387, %v406
      %408 = vdwg.mxu0
      %v409 = vld [vmem:[%s4] sm:$0xff]
      %v410 = vld [vmem:[%s5] sm:$0x1]
      %v412 = vperm.slane %v410, 0
      %414 = vmatpush.xpose.msra.mxu0 0.0
      %415 = vmatpush.xpose.msra.mxu0 0.0
      %416 = vmatpush.xpose.msra.mxu0 0.0
      %417 = vmatpush.xpose.msra.mxu0 0.0
      %418 = vmatpush.xpose.msra.mxu0 0.0
      %419 = vmatpush.xpose.msra.mxu0 0.0
      %420 = vmatpush.xpose.msra.mxu0 0.0
      %421 = vmatpush.xpose.msra.mxu0 0.0
      %422 = vmatpush.xpose.msra.mxu0 0.0
      %423 = vmatpush.xpose.msra.mxu0 0.0
      %424 = vmatpush.xpose.msra.mxu0 0.0
      %425 = vmatpush.xpose.msra.mxu0 0.0
      %426 = vmatpush.xpose.msra.mxu0 0.0
      %427 = vmatpush.xpose.msra.mxu0 0.0
      %428 = vmatpush.xpose.msra.mxu0 0.0
      %429 = vmatpush.xpose.msra.mxu0 %v409
      %430 = vmatmul.f32.gmra.mxu0 %v383
      %v431 = vpop.f32.mrf.mxu0
      %v432 = vadd.f32 %v412, %v431
      %433 = vdwg.mxu0
      %v434 = vld [vmem:[%s6] sm:$0xff]
      %v435 = vld [vmem:[%s7] sm:$0x1]
      %v437 = vperm.slane %v435, 0
      %439 = vmatpush.xpose.msra.mxu0 0.0
      %440 = vmatpush.xpose.msra.mxu0 0.0
      %441 = vmatpush.xpose.msra.mxu0 0.0
      %442 = vmatpush.xpose.msra.mxu0 0.0
      %443 = vmatpush.xpose.msra.mxu0 0.0
      %444 = vmatpush.xpose.msra.mxu0 0.0
      %445 = vmatpush.xpose.msra.mxu0 0.0
      %446 = vmatpush.xpose.msra.mxu0 0.0
      %447 = vmatpush.xpose.msra.mxu0 0.0
      %448 = vmatpush.xpose.msra.mxu0 0.0
      %449 = vmatpush.xpose.msra.mxu0 0.0
      %450 = vmatpush.xpose.msra.mxu0 0.0
      %451 = vmatpush.xpose.msra.mxu0 0.0
      %452 = vmatpush.xpose.msra.mxu0 0.0
      %453 = vmatpush.xpose.msra.mxu0 0.0
      %454 = vmatpush.xpose.msra.mxu0 %v434
      %455 = vmatmul.f32.gmra.mxu0 %v383
      %v456 = vpop.f32.mrf.mxu0
      %v457 = vadd.f32 %v437, %v456
      %458 = vdwg.mxu0
      %vm459 = vcmask 64512
      %v461 = vsel %vm459, %v407, 0
      %v464 = vsel %vm459, %v432, 0
      %466 = vmatpush.xpose.msra.mxu0 0.0
      %467 = vmatpush.xpose.msra.mxu0 0.0
      %468 = vmatpush.xpose.msra.mxu0 0.0
      %469 = vmatpush.xpose.msra.mxu0 0.0
      %470 = vmatpush.xpose.msra.mxu0 0.0
      %471 = vmatpush.xpose.msra.mxu0 0.0
      %472 = vmatpush.xpose.msra.mxu0 0.0
      %473 = vmatpush.xpose.msra.mxu0 0.0
      %474 = vmatpush.xpose.msra.mxu0 0.0
      %475 = vmatpush.xpose.msra.mxu0 0.0
      %476 = vmatpush.xpose.msra.mxu0 0.0
      %477 = vmatpush.xpose.msra.mxu0 0.0
      %478 = vmatpush.xpose.msra.mxu0 0.0
      %479 = vmatpush.xpose.msra.mxu0 0.0
      %480 = vmatpush.xpose.msra.mxu0 0.0
      %481 = vmatpush.xpose.msra.mxu0 %v464
      %482 = vmatmul.f32.gmra.mxu0 %v461
      %v483 = vpop.f32.mrf.mxu0
      %v484 = vadd.f32 0.0, %v483
      %485 = vdwg.mxu0
      %v486 = vrcp.pop 2.828427
      %v487 = vmul.f32 2.828427, %v486
      %v488 = vsub.f32 1.0, %v487
      %v489 = vmul.f32 %v486, %v488
      %v490 = vadd.f32 %v486, %v489
      %vm491 = vweird.f32 %v486
      %v492 = vsel %vm491, %v486, %v490
      %v493 = vmul.f32 %v484, %v492
      %v494 = vsel %vm459, %v493, -inf
      %495 = vmax.xlane.f32.xlu0 %v494
      %v496 = vpop.xlane.xlu0 %495
      %v497 = vsub.f32 %v493, %v496
      %v498 = vmul.f32 %v497, 1.442695
      %v499 = vpow.pop %v498
      %v500 = vsel %vm459, %v499, 0.0
      %501 = vadd.xlane.f32.xlu0 %v500
      %v502 = vpop.xlane.xlu0 %501
      %v503 = vrcp.pop %v502
      %v504 = vmul.f32 %v502, %v503
      %v505 = vsub.f32 1.0, %v504
      %v506 = vmul.f32 %v503, %v505
      %v507 = vadd.f32 %v503, %v506
      %vm508 = vweird.f32 %v502
      %vm509 = vweird.f32 %v503
      %vm510 = vmor %vm508, %vm509
      %v511 = vsel %vm510, %v503, %v507
      %v512 = vand.u32 2147483647, %v502
      %vm513 = vcmp.eq.f32.partialorder %v512, 8.507059e+37
      %v514 = vand.u32 %v502, 2147483648
      %v515 = vor.u32 1.1754944e-38, %v514
      %v516 = vsel %vm513, %v515, %v511
      %v517 = vmul.f32 %v499, %v516
      %v519 = vsel %vm459, %v517, 0
      %521 = vmatpush.msra.mxu0 0.0
      %522 = vmatpush.msra.mxu0 0.0
      %523 = vmatpush.msra.mxu0 0.0
      %524 = vmatpush.msra.mxu0 0.0
      %525 = vmatpush.msra.mxu0 0.0
      %526 = vmatpush.msra.mxu0 0.0
      %527 = vmatpush.msra.mxu0 0.0
      %528 = vmatpush.msra.mxu0 0.0
      %529 = vmatpush.msra.mxu0 0.0
      %530 = vmatpush.msra.mxu0 0.0
      %531 = vmatpush.msra.mxu0 0.0
      %532 = vmatpush.msra.mxu0 0.0
      %533 = vmatpush.msra.mxu0 0.0
      %534 = vmatpush.msra.mxu0 0.0
      %535 = vmatpush.msra.mxu0 0.0
      %536 = vmatpush.msra.mxu0 %v457
      %537 = vmatmul.f32.gmra.mxu0 %v519
      %v538 = vpop.f32.mrf.mxu0
      %v539 = vadd.f32 0.0, %v538
      %540 = vdwg.mxu0
      %v541 = vld [vmem:[%s8] sm:$0xff]
      %s542 = scalar_lea.vmem %s2, 8
      %v543 = vld [vmem:[%s542] sm:$0xff]
      %s544 = scalar_lea.vmem %s3, 1
      %v545 = vld [vmem:[%s544] sm:$0x1]
      %v547 = vperm.slane %v545, 0
      %549 = vmatpush.xpose.msra.mxu0 0.0
      %550 = vmatpush.xpose.msra.mxu0 0.0
      %551 = vmatpush.xpose.msra.mxu0 0.0
      %552 = vmatpush.xpose.msra.mxu0 0.0
      %553 = vmatpush.xpose.msra.mxu0 0.0
      %554 = vmatpush.xpose.msra.mxu0 0.0
      %555 = vmatpush.xpose.msra.mxu0 0.0
      %556 = vmatpush.xpose.msra.mxu0 0.0
      %557 = vmatpush.xpose.msra.mxu0 0.0
      %558 = vmatpush.xpose.msra.mxu0 0.0
      %559 = vmatpush.xpose.msra.mxu0 0.0
      %560 = vmatpush.xpose.msra.mxu0 0.0
      %561 = vmatpush.xpose.msra.mxu0 0.0
      %562 = vmatpush.xpose.msra.mxu0 0.0
      %563 = vmatpush.xpose.msra.mxu0 0.0
      %564 = vmatpush.xpose.msra.mxu0 %v543
      %565 = vmatmul.f32.gmra.mxu0 %v383
      %v566 = vpop.f32.mrf.mxu0
      %v567 = vadd.f32 %v547, %v566
      %568 = vdwg.mxu0
      %s569 = scalar_lea.vmem %s4, 8
      %v570 = vld [vmem:[%s569] sm:$0xff]
      %s571 = scalar_lea.vmem %s5, 1
      %v572 = vld [vmem:[%s571] sm:$0x1]
      %v574 = vperm.slane %v572, 0
      %576 = vmatpush.xpose.msra.mxu0 0.0
      %577 = vmatpush.xpose.msra.mxu0 0.0
      %578 = vmatpush.xpose.msra.mxu0 0.0
      %579 = vmatpush.xpose.msra.mxu0 0.0
      %580 = vmatpush.xpose.msra.mxu0 0.0
      %581 = vmatpush.xpose.msra.mxu0 0.0
      %582 = vmatpush.xpose.msra.mxu0 0.0
      %583 = vmatpush.xpose.msra.mxu0 0.0
      %584 = vmatpush.xpose.msra.mxu0 0.0
      %585 = vmatpush.xpose.msra.mxu0 0.0
      %586 = vmatpush.xpose.msra.mxu0 0.0
      %587 = vmatpush.xpose.msra.mxu0 0.0
      %588 = vmatpush.xpose.msra.mxu0 0.0
      %589 = vmatpush.xpose.msra.mxu0 0.0
      %590 = vmatpush.xpose.msra.mxu0 0.0
      %591 = vmatpush.xpose.msra.mxu0 %v570
      %592 = vmatmul.f32.gmra.mxu0 %v383
      %v593 = vpop.f32.mrf.mxu0
      %v594 = vadd.f32 %v574, %v593
      %595 = vdwg.mxu0
      %s596 = scalar_lea.vmem %s6, 8
      %v597 = vld [vmem:[%s596] sm:$0xff]
      %s598 = scalar_lea.vmem %s7, 1
      %v599 = vld [vmem:[%s598] sm:$0x1]
      %v601 = vperm.slane %v599, 0
      %603 = vmatpush.xpose.msra.mxu0 0.0
      %604 = vmatpush.xpose.msra.mxu0 0.0
      %605 = vmatpush.xpose.msra.mxu0 0.0
      %606 = vmatpush.xpose.msra.mxu0 0.0
      %607 = vmatpush.xpose.msra.mxu0 0.0
      %608 = vmatpush.xpose.msra.mxu0 0.0
      %609 = vmatpush.xpose.msra.mxu0 0.0
      %610 = vmatpush.xpose.msra.mxu0 0.0
      %611 = vmatpush.xpose.msra.mxu0 0.0
      %612 = vmatpush.xpose.msra.mxu0 0.0
      %613 = vmatpush.xpose.msra.mxu0 0.0
      %614 = vmatpush.xpose.msra.mxu0 0.0
      %615 = vmatpush.xpose.msra.mxu0 0.0
      %616 = vmatpush.xpose.msra.mxu0 0.0
      %617 = vmatpush.xpose.msra.mxu0 0.0
      %618 = vmatpush.xpose.msra.mxu0 %v597
      %619 = vmatmul.f32.gmra.mxu0 %v383
      %v620 = vpop.f32.mrf.mxu0
      %v621 = vadd.f32 %v601, %v620
      %622 = vdwg.mxu0
      %v624 = vsel %vm459, %v567, 0
      %v627 = vsel %vm459, %v594, 0
      %629 = vmatpush.xpose.msra.mxu0 0.0
      %630 = vmatpush.xpose.msra.mxu0 0.0
      %631 = vmatpush.xpose.msra.mxu0 0.0
      %632 = vmatpush.xpose.msra.mxu0 0.0
      %633 = vmatpush.xpose.msra.mxu0 0.0
      %634 = vmatpush.xpose.msra.mxu0 0.0
      %635 = vmatpush.xpose.msra.mxu0 0.0
      %636 = vmatpush.xpose.msra.mxu0 0.0
      %637 = vmatpush.xpose.msra.mxu0 0.0
      %638 = vmatpush.xpose.msra.mxu0 0.0
      %639 = vmatpush.xpose.msra.mxu0 0.0
      %640 = vmatpush.xpose.msra.mxu0 0.0
      %641 = vmatpush.xpose.msra.mxu0 0.0
      %642 = vmatpush.xpose.msra.mxu0 0.0
      %643 = vmatpush.xpose.msra.mxu0 0.0
      %644 = vmatpush.xpose.msra.mxu0 %v627
      %645 = vmatmul.f32.gmra.mxu0 %v624
      %v646 = vpop.f32.mrf.mxu0
      %v647 = vadd.f32 0.0, %v646
      %648 = vdwg.mxu0
      %v649 = vmul.f32 %v647, %v492
      %v650 = vsel %vm459, %v649, -inf
      %651 = vmax.xlane.f32.xlu0 %v650
      %v652 = vpop.xlane.xlu0 %651
      %v653 = vsub.f32 %v649, %v652
      %v654 = vmul.f32 %v653, 1.442695
      %v655 = vpow.pop %v654
      %v656 = vsel %vm459, %v655, 0.0
      %657 = vadd.xlane.f32.xlu0 %v656
      %v658 = vpop.xlane.xlu0 %657
      %v659 = vrcp.pop %v658
      %v660 = vmul.f32 %v658, %v659
      %v661 = vsub.f32 1.0, %v660
      %v662 = vmul.f32 %v659, %v661
      %v663 = vadd.f32 %v659, %v662
      %vm664 = vweird.f32 %v658
      %vm665 = vweird.f32 %v659
      %vm666 = vmor %vm664, %vm665
      %v667 = vsel %vm666, %v659, %v663
      %v668 = vand.u32 2147483647, %v658
      %vm669 = vcmp.eq.f32.partialorder %v668, 8.507059e+37
      %v670 = vand.u32 %v658, 2147483648
      %v671 = vor.u32 1.1754944e-38, %v670
      %v672 = vsel %vm669, %v671, %v667
      %v673 = vmul.f32 %v655, %v672
      %v675 = vsel %vm459, %v673, 0
      %677 = vmatpush.msra.mxu0 0.0
      %678 = vmatpush.msra.mxu0 0.0
      %679 = vmatpush.msra.mxu0 0.0
      %680 = vmatpush.msra.mxu0 0.0
      %681 = vmatpush.msra.mxu0 0.0
      %682 = vmatpush.msra.mxu0 0.0
      %683 = vmatpush.msra.mxu0 0.0
      %684 = vmatpush.msra.mxu0 0.0
      %685 = vmatpush.msra.mxu0 0.0
      %686 = vmatpush.msra.mxu0 0.0
      %687 = vmatpush.msra.mxu0 0.0
      %688 = vmatpush.msra.mxu0 0.0
      %689 = vmatpush.msra.mxu0 0.0
      %690 = vmatpush.msra.mxu0 0.0
      %691 = vmatpush.msra.mxu0 0.0
      %692 = vmatpush.msra.mxu0 %v621
      %693 = vmatmul.f32.gmra.mxu0 %v675
      %v694 = vpop.f32.mrf.mxu0
      %v695 = vadd.f32 0.0, %v694
      %696 = vdwg.mxu0
      %s697 = scalar_lea.vmem %s8, 8
      %v698 = vld [vmem:[%s697] sm:$0xff]
      %v700 = vsel %vm459, %v695, 0
      %702 = vmatpush.msra.mxu0 0.0
      %703 = vmatpush.msra.mxu0 0.0
      %704 = vmatpush.msra.mxu0 0.0
      %705 = vmatpush.msra.mxu0 0.0
      %706 = vmatpush.msra.mxu0 0.0
      %707 = vmatpush.msra.mxu0 0.0
      %708 = vmatpush.msra.mxu0 0.0
      %709 = vmatpush.msra.mxu0 0.0
      %710 = vmatpush.msra.mxu0 0.0
      %711 = vmatpush.msra.mxu0 0.0
      %712 = vmatpush.msra.mxu0 0.0
      %713 = vmatpush.msra.mxu0 0.0
      %714 = vmatpush.msra.mxu0 0.0
      %715 = vmatpush.msra.mxu0 0.0
      %716 = vmatpush.msra.mxu0 0.0
      %717 = vmatpush.msra.mxu0 %v698
      %718 = vmatmul.f32.gmra.mxu0 %v700
      %v719 = vpop.f32.mrf.mxu0
      %v720 = vadd.f32 0.0, %v719
      %721 = vdwg.mxu0
      %v723 = vsel %vm459, %v539, 0
      %725 = vmatpush.msra.mxu0 0.0
      %726 = vmatpush.msra.mxu0 0.0
      %727 = vmatpush.msra.mxu0 0.0
      %728 = vmatpush.msra.mxu0 0.0
      %729 = vmatpush.msra.mxu0 0.0
      %730 = vmatpush.msra.mxu0 0.0
      %731 = vmatpush.msra.mxu0 0.0
      %732 = vmatpush.msra.mxu0 0.0
      %733 = vmatpush.msra.mxu0 0.0
      %734 = vmatpush.msra.mxu0 0.0
      %735 = vmatpush.msra.mxu0 0.0
      %736 = vmatpush.msra.mxu0 0.0
      %737 = vmatpush.msra.mxu0 0.0
      %738 = vmatpush.msra.mxu0 0.0
      %739 = vmatpush.msra.mxu0 0.0
      %740 = vmatpush.msra.mxu0 %v541
      %741 = vmatmul.f32.gmra.mxu0 %v723
      %v742 = vpop.f32.mrf.mxu0
      %v743 = vadd.f32 %v720, %v742
      %744 = vdwg.mxu0
      %s745 = scalar_lea.vmem %s2, 16
      %v746 = vld [vmem:[%s745] sm:$0xff]
      %s747 = scalar_lea.vmem %s3, 2
      %v748 = vld [vmem:[%s747] sm:$0x1]
      %v750 = vperm.slane %v748, 0
      %752 = vmatpush.xpose.msra.mxu0 0.0
      %753 = vmatpush.xpose.msra.mxu0 0.0
      %754 = vmatpush.xpose.msra.mxu0 0.0
      %755 = vmatpush.xpose.msra.mxu0 0.0
      %756 = vmatpush.xpose.msra.mxu0 0.0
      %757 = vmatpush.xpose.msra.mxu0 0.0
      %758 = vmatpush.xpose.msra.mxu0 0.0
      %759 = vmatpush.xpose.msra.mxu0 0.0
      %760 = vmatpush.xpose.msra.mxu0 0.0
      %761 = vmatpush.xpose.msra.mxu0 0.0
      %762 = vmatpush.xpose.msra.mxu0 0.0
      %763 = vmatpush.xpose.msra.mxu0 0.0
      %764 = vmatpush.xpose.msra.mxu0 0.0
      %765 = vmatpush.xpose.msra.mxu0 0.0
      %766 = vmatpush.xpose.msra.mxu0 0.0
      %767 = vmatpush.xpose.msra.mxu0 %v746
      %768 = vmatmul.f32.gmra.mxu0 %v383
      %v769 = vpop.f32.mrf.mxu0
      %v770 = vadd.f32 %v750, %v769
      %771 = vdwg.mxu0
      %s772 = scalar_lea.vmem %s4, 16
      %v773 = vld [vmem:[%s772] sm:$0xff]
      %s774 = scalar_lea.vmem %s5, 2
      %v775 = vld [vmem:[%s774] sm:$0x1]
      %v777 = vperm.slane %v775, 0
      %779 = vmatpush.xpose.msra.mxu0 0.0
      %780 = vmatpush.xpose.msra.mxu0 0.0
      %781 = vmatpush.xpose.msra.mxu0 0.0
      %782 = vmatpush.xpose.msra.mxu0 0.0
      %783 = vmatpush.xpose.msra.mxu0 0.0
      %784 = vmatpush.xpose.msra.mxu0 0.0
      %785 = vmatpush.xpose.msra.mxu0 0.0
      %786 = vmatpush.xpose.msra.mxu0 0.0
      %787 = vmatpush.xpose.msra.mxu0 0.0
      %788 = vmatpush.xpose.msra.mxu0 0.0
      %789 = vmatpush.xpose.msra.mxu0 0.0
      %790 = vmatpush.xpose.msra.mxu0 0.0
      %791 = vmatpush.xpose.msra.mxu0 0.0
      %792 = vmatpush.xpose.msra.mxu0 0.0
      %793 = vmatpush.xpose.msra.mxu0 0.0
      %794 = vmatpush.xpose.msra.mxu0 %v773
      %795 = vmatmul.f32.gmra.mxu0 %v383
      %v796 = vpop.f32.mrf.mxu0
      %v797 = vadd.f32 %v777, %v796
      %798 = vdwg.mxu0
      %s799 = scalar_lea.vmem %s6, 16
      %v800 = vld [vmem:[%s799] sm:$0xff]
      %s801 = scalar_lea.vmem %s7, 2
      %v802 = vld [vmem:[%s801] sm:$0x1]
      %v804 = vperm.slane %v802, 0
      %806 = vmatpush.xpose.msra.mxu0 0.0
      %807 = vmatpush.xpose.msra.mxu0 0.0
      %808 = vmatpush.xpose.msra.mxu0 0.0
      %809 = vmatpush.xpose.msra.mxu0 0.0
      %810 = vmatpush.xpose.msra.mxu0 0.0
      %811 = vmatpush.xpose.msra.mxu0 0.0
      %812 = vmatpush.xpose.msra.mxu0 0.0
      %813 = vmatpush.xpose.msra.mxu0 0.0
      %814 = vmatpush.xpose.msra.mxu0 0.0
      %815 = vmatpush.xpose.msra.mxu0 0.0
      %816 = vmatpush.xpose.msra.mxu0 0.0
      %817 = vmatpush.xpose.msra.mxu0 0.0
      %818 = vmatpush.xpose.msra.mxu0 0.0
      %819 = vmatpush.xpose.msra.mxu0 0.0
      %820 = vmatpush.xpose.msra.mxu0 0.0
      %821 = vmatpush.xpose.msra.mxu0 %v800
      %822 = vmatmul.f32.gmra.mxu0 %v383
      %v823 = vpop.f32.mrf.mxu0
      %v824 = vadd.f32 %v804, %v823
      %825 = vdwg.mxu0
      %v827 = vsel %vm459, %v770, 0
      %v830 = vsel %vm459, %v797, 0
      %832 = vmatpush.xpose.msra.mxu0 0.0
      %833 = vmatpush.xpose.msra.mxu0 0.0
      %834 = vmatpush.xpose.msra.mxu0 0.0
      %835 = vmatpush.xpose.msra.mxu0 0.0
      %836 = vmatpush.xpose.msra.mxu0 0.0
      %837 = vmatpush.xpose.msra.mxu0 0.0
      %838 = vmatpush.xpose.msra.mxu0 0.0
      %839 = vmatpush.xpose.msra.mxu0 0.0
      %840 = vmatpush.xpose.msra.mxu0 0.0
      %841 = vmatpush.xpose.msra.mxu0 0.0
      %842 = vmatpush.xpose.msra.mxu0 0.0
      %843 = vmatpush.xpose.msra.mxu0 0.0
      %844 = vmatpush.xpose.msra.mxu0 0.0
      %845 = vmatpush.xpose.msra.mxu0 0.0
      %846 = vmatpush.xpose.msra.mxu0 0.0
      %847 = vmatpush.xpose.msra.mxu0 %v830
      %848 = vmatmul.f32.gmra.mxu0 %v827
      %v849 = vpop.f32.mrf.mxu0
      %v850 = vadd.f32 0.0, %v849
      %851 = vdwg.mxu0
      %v852 = vmul.f32 %v850, %v492
      %v853 = vsel %vm459, %v852, -inf
      %854 = vmax.xlane.f32.xlu0 %v853
      %v855 = vpop.xlane.xlu0 %854
      %v856 = vsub.f32 %v852, %v855
      %v857 = vmul.f32 %v856, 1.442695
      %v858 = vpow.pop %v857
      %v859 = vsel %vm459, %v858, 0.0
      %860 = vadd.xlane.f32.xlu0 %v859
      %v861 = vpop.xlane.xlu0 %860
      %v862 = vrcp.pop %v861
      %v863 = vmul.f32 %v861, %v862
      %v864 = vsub.f32 1.0, %v863
      %v865 = vmul.f32 %v862, %v864
      %v866 = vadd.f32 %v862, %v865
      %vm867 = vweird.f32 %v861
      %vm868 = vweird.f32 %v862
      %vm869 = vmor %vm867, %vm868
      %v870 = vsel %vm869, %v862, %v866
      %v871 = vand.u32 2147483647, %v861
      %vm872 = vcmp.eq.f32.partialorder %v871, 8.507059e+37
      %v873 = vand.u32 %v861, 2147483648
      %v874 = vor.u32 1.1754944e-38, %v873
      %v875 = vsel %vm872, %v874, %v870
      %v876 = vmul.f32 %v858, %v875
      %v878 = vsel %vm459, %v876, 0
      %880 = vmatpush.msra.mxu0 0.0
      %881 = vmatpush.msra.mxu0 0.0
      %882 = vmatpush.msra.mxu0 0.0
      %883 = vmatpush.msra.mxu0 0.0
      %884 = vmatpush.msra.mxu0 0.0
      %885 = vmatpush.msra.mxu0 0.0
      %886 = vmatpush.msra.mxu0 0.0
      %887 = vmatpush.msra.mxu0 0.0
      %888 = vmatpush.msra.mxu0 0.0
      %889 = vmatpush.msra.mxu0 0.0
      %890 = vmatpush.msra.mxu0 0.0
      %891 = vmatpush.msra.mxu0 0.0
      %892 = vmatpush.msra.mxu0 0.0
      %893 = vmatpush.msra.mxu0 0.0
      %894 = vmatpush.msra.mxu0 0.0
      %895 = vmatpush.msra.mxu0 %v824
      %896 = vmatmul.f32.gmra.mxu0 %v878
      %v897 = vpop.f32.mrf.mxu0
      %v898 = vadd.f32 0.0, %v897
      %899 = vdwg.mxu0
      %s900 = scalar_lea.vmem %s8, 16
      %v901 = vld [vmem:[%s900] sm:$0xff]
      %v903 = vsel %vm459, %v898, 0
      %905 = vmatpush.msra.mxu0 0.0
      %906 = vmatpush.msra.mxu0 0.0
      %907 = vmatpush.msra.mxu0 0.0
      %908 = vmatpush.msra.mxu0 0.0
      %909 = vmatpush.msra.mxu0 0.0
      %910 = vmatpush.msra.mxu0 0.0
      %911 = vmatpush.msra.mxu0 0.0
      %912 = vmatpush.msra.mxu0 0.0
      %913 = vmatpush.msra.mxu0 0.0
      %914 = vmatpush.msra.mxu0 0.0
      %915 = vmatpush.msra.mxu0 0.0
      %916 = vmatpush.msra.mxu0 0.0
      %917 = vmatpush.msra.mxu0 0.0
      %918 = vmatpush.msra.mxu0 0.0
      %919 = vmatpush.msra.mxu0 0.0
      %920 = vmatpush.msra.mxu0 %v901
      %921 = vmatmul.f32.gmra.mxu0 %v903
      %v922 = vpop.f32.mrf.mxu0
      %v923 = vadd.f32 0.0, %v922
      %924 = vdwg.mxu0
      %v925 = vadd.f32 %v743, %v923
      %s926 = scalar_lea.vmem %s2, 24
      %v927 = vld [vmem:[%s926] sm:$0xff]
      %s928 = scalar_lea.vmem %s3, 3
      %v929 = vld [vmem:[%s928] sm:$0x1]
      %v931 = vperm.slane %v929, 0
      %933 = vmatpush.xpose.msra.mxu0 0.0
      %934 = vmatpush.xpose.msra.mxu0 0.0
      %935 = vmatpush.xpose.msra.mxu0 0.0
      %936 = vmatpush.xpose.msra.mxu0 0.0
      %937 = vmatpush.xpose.msra.mxu0 0.0
      %938 = vmatpush.xpose.msra.mxu0 0.0
      %939 = vmatpush.xpose.msra.mxu0 0.0
      %940 = vmatpush.xpose.msra.mxu0 0.0
      %941 = vmatpush.xpose.msra.mxu0 0.0
      %942 = vmatpush.xpose.msra.mxu0 0.0
      %943 = vmatpush.xpose.msra.mxu0 0.0
      %944 = vmatpush.xpose.msra.mxu0 0.0
      %945 = vmatpush.xpose.msra.mxu0 0.0
      %946 = vmatpush.xpose.msra.mxu0 0.0
      %947 = vmatpush.xpose.msra.mxu0 0.0
      %948 = vmatpush.xpose.msra.mxu0 %v927
      %949 = vmatmul.f32.gmra.mxu0 %v383
      %v950 = vpop.f32.mrf.mxu0
      %v951 = vadd.f32 %v931, %v950
      %952 = vdwg.mxu0
      %s953 = scalar_lea.vmem %s4, 24
      %v954 = vld [vmem:[%s953] sm:$0xff]
      %s955 = scalar_lea.vmem %s5, 3
      %v956 = vld [vmem:[%s955] sm:$0x1]
      %v958 = vperm.slane %v956, 0
      %960 = vmatpush.xpose.msra.mxu0 0.0
      %961 = vmatpush.xpose.msra.mxu0 0.0
      %962 = vmatpush.xpose.msra.mxu0 0.0
      %963 = vmatpush.xpose.msra.mxu0 0.0
      %964 = vmatpush.xpose.msra.mxu0 0.0
      %965 = vmatpush.xpose.msra.mxu0 0.0
      %966 = vmatpush.xpose.msra.mxu0 0.0
      %967 = vmatpush.xpose.msra.mxu0 0.0
      %968 = vmatpush.xpose.msra.mxu0 0.0
      %969 = vmatpush.xpose.msra.mxu0 0.0
      %970 = vmatpush.xpose.msra.mxu0 0.0
      %971 = vmatpush.xpose.msra.mxu0 0.0
      %972 = vmatpush.xpose.msra.mxu0 0.0
      %973 = vmatpush.xpose.msra.mxu0 0.0
      %974 = vmatpush.xpose.msra.mxu0 0.0
      %975 = vmatpush.xpose.msra.mxu0 %v954
      %976 = vmatmul.f32.gmra.mxu0 %v383
      %v977 = vpop.f32.mrf.mxu0
      %v978 = vadd.f32 %v958, %v977
      %979 = vdwg.mxu0
      %s980 = scalar_lea.vmem %s6, 24
      %v981 = vld [vmem:[%s980] sm:$0xff]
      %s982 = scalar_lea.vmem %s7, 3
      %v983 = vld [vmem:[%s982] sm:$0x1]
      %v985 = vperm.slane %v983, 0
      %987 = vmatpush.xpose.msra.mxu0 0.0
      %988 = vmatpush.xpose.msra.mxu0 0.0
      %989 = vmatpush.xpose.msra.mxu0 0.0
      %990 = vmatpush.xpose.msra.mxu0 0.0
      %991 = vmatpush.xpose.msra.mxu0 0.0
      %992 = vmatpush.xpose.msra.mxu0 0.0
      %993 = vmatpush.xpose.msra.mxu0 0.0
      %994 = vmatpush.xpose.msra.mxu0 0.0
      %995 = vmatpush.xpose.msra.mxu0 0.0
      %996 = vmatpush.xpose.msra.mxu0 0.0
      %997 = vmatpush.xpose.msra.mxu0 0.0
      %998 = vmatpush.xpose.msra.mxu0 0.0
      %999 = vmatpush.xpose.msra.mxu0 0.0
      %1000 = vmatpush.xpose.msra.mxu0 0.0
      %1001 = vmatpush.xpose.msra.mxu0 0.0
      %1002 = vmatpush.xpose.msra.mxu0 %v981
      %1003 = vmatmul.f32.gmra.mxu0 %v383
      %v1004 = vpop.f32.mrf.mxu0
      %v1005 = vadd.f32 %v985, %v1004
      %1006 = vdwg.mxu0
      %v1008 = vsel %vm459, %v951, 0
      %v1011 = vsel %vm459, %v978, 0
      %1013 = vmatpush.xpose.msra.mxu0 0.0
      %1014 = vmatpush.xpose.msra.mxu0 0.0
      %1015 = vmatpush.xpose.msra.mxu0 0.0
      %1016 = vmatpush.xpose.msra.mxu0 0.0
      %1017 = vmatpush.xpose.msra.mxu0 0.0
      %1018 = vmatpush.xpose.msra.mxu0 0.0
      %1019 = vmatpush.xpose.msra.mxu0 0.0
      %1020 = vmatpush.xpose.msra.mxu0 0.0
      %1021 = vmatpush.xpose.msra.mxu0 0.0
      %1022 = vmatpush.xpose.msra.mxu0 0.0
      %1023 = vmatpush.xpose.msra.mxu0 0.0
      %1024 = vmatpush.xpose.msra.mxu0 0.0
      %1025 = vmatpush.xpose.msra.mxu0 0.0
      %1026 = vmatpush.xpose.msra.mxu0 0.0
      %1027 = vmatpush.xpose.msra.mxu0 0.0
      %1028 = vmatpush.xpose.msra.mxu0 %v1011
      %1029 = vmatmul.f32.gmra.mxu0 %v1008
      %v1030 = vpop.f32.mrf.mxu0
      %v1031 = vadd.f32 0.0, %v1030
      %1032 = vdwg.mxu0
      %v1033 = vmul.f32 %v1031, %v492
      %v1034 = vsel %vm459, %v1033, -inf
      %1035 = vmax.xlane.f32.xlu0 %v1034
      %v1036 = vpop.xlane.xlu0 %1035
      %v1037 = vsub.f32 %v1033, %v1036
      %v1038 = vmul.f32 %v1037, 1.442695
      %v1039 = vpow.pop %v1038
      %v1040 = vsel %vm459, %v1039, 0.0
      %1041 = vadd.xlane.f32.xlu0 %v1040
      %v1042 = vpop.xlane.xlu0 %1041
      %v1043 = vrcp.pop %v1042
      %v1044 = vmul.f32 %v1042, %v1043
      %v1045 = vsub.f32 1.0, %v1044
      %v1046 = vmul.f32 %v1043, %v1045
      %v1047 = vadd.f32 %v1043, %v1046
      %vm1048 = vweird.f32 %v1042
      %vm1049 = vweird.f32 %v1043
      %vm1050 = vmor %vm1048, %vm1049
      %v1051 = vsel %vm1050, %v1043, %v1047
      %v1052 = vand.u32 2147483647, %v1042
      %vm1053 = vcmp.eq.f32.partialorder %v1052, 8.507059e+37
      %v1054 = vand.u32 %v1042, 2147483648
      %v1055 = vor.u32 1.1754944e-38, %v1054
      %v1056 = vsel %vm1053, %v1055, %v1051
      %v1057 = vmul.f32 %v1039, %v1056
      %v1059 = vsel %vm459, %v1057, 0
      %1061 = vmatpush.msra.mxu0 0.0
      %1062 = vmatpush.msra.mxu0 0.0
      %1063 = vmatpush.msra.mxu0 0.0
      %1064 = vmatpush.msra.mxu0 0.0
      %1065 = vmatpush.msra.mxu0 0.0
      %1066 = vmatpush.msra.mxu0 0.0
      %1067 = vmatpush.msra.mxu0 0.0
      %1068 = vmatpush.msra.mxu0 0.0
      %1069 = vmatpush.msra.mxu0 0.0
      %1070 = vmatpush.msra.mxu0 0.0
      %1071 = vmatpush.msra.mxu0 0.0
      %1072 = vmatpush.msra.mxu0 0.0
      %1073 = vmatpush.msra.mxu0 0.0
      %1074 = vmatpush.msra.mxu0 0.0
      %1075 = vmatpush.msra.mxu0 0.0
      %1076 = vmatpush.msra.mxu0 %v1005
      %1077 = vmatmul.f32.gmra.mxu0 %v1059
      %v1078 = vpop.f32.mrf.mxu0
      %v1079 = vadd.f32 0.0, %v1078
      %1080 = vdwg.mxu0
      %s1081 = scalar_lea.vmem %s8, 24
      %v1082 = vld [vmem:[%s1081] sm:$0xff]
      %v1084 = vsel %vm459, %v1079, 0
      %1086 = vmatpush.msra.mxu0 0.0
      %1087 = vmatpush.msra.mxu0 0.0
      %1088 = vmatpush.msra.mxu0 0.0
      %1089 = vmatpush.msra.mxu0 0.0
      %1090 = vmatpush.msra.mxu0 0.0
      %1091 = vmatpush.msra.mxu0 0.0
      %1092 = vmatpush.msra.mxu0 0.0
      %1093 = vmatpush.msra.mxu0 0.0
      %1094 = vmatpush.msra.mxu0 0.0
      %1095 = vmatpush.msra.mxu0 0.0
      %1096 = vmatpush.msra.mxu0 0.0
      %1097 = vmatpush.msra.mxu0 0.0
      %1098 = vmatpush.msra.mxu0 0.0
      %1099 = vmatpush.msra.mxu0 0.0
      %1100 = vmatpush.msra.mxu0 0.0
      %1101 = vmatpush.msra.mxu0 %v1082
      %1102 = vmatmul.f32.gmra.mxu0 %v1084
      %v1103 = vpop.f32.mrf.mxu0
      %v1104 = vadd.f32 0.0, %v1103
      %1105 = vdwg.mxu0
      %v1106 = vadd.f32 %v925, %v1104
      %v1107 = vadd.f32 %v355, %v1106
      %v1108 = vld [vmem:[%s9] sm:$0x1]
      %v1110 = vperm.slane %v1108, 0
      %v1112 = vadd.f32 %v1107, %v1110
      %1113 = vst [vmem:[%s354] sm:$0xff] %v1112
      %p1114 = scmp.lt.s32.totalorder %s21, 1
      %s1115 = scalar_select %p1114, %s21, 1
      %s1116 = smul.addr %s1115, 8
      %s1117 = scalar_lea.vmem %s10, %s1116
      // Predicated region
      $region61: #{mha_block_forward.2} parent=59 // pred_check
        %p1118 = pneg %p254
      $region62: #{mha_block_forward.2} parent=59 // pred_check_branch
        %1120 = sbr.rel (%p1118) target = $region64
      $region63: #{mha_block_forward.2} parent=59 // pred_region
        _
      $region64: #{mha_block_forward.2} parent=59 // pred_fallthru
        _
    $region60: #{mha_block_forward.2} parent=5 // pred_fallthru
      _
    %p1121 = scmp.le.s32.totalorder 2, %s16
    // Predicated region
    $region65: #{mha_block_forward.2} parent=5 // pred_check
      %p1122 = pneg %p1121
    $region66: #{mha_block_forward.2} parent=5 // pred_check_branch
      %1124 = sbr.rel (%p1122) target = $region68
    $region67: #{mha_block_forward.2} parent=5 // pred_region
      %s1125 = ssub.s32 %s16, 2
      // Predicated region
      $region69: #{mha_block_forward.2} parent=67 // pred_check
        %p1126 = pneg %p260
      $region70: #{mha_block_forward.2} parent=67 // pred_check_branch
        %1128 = sbr.rel (%p1126) target = $region72
      $region71: #{mha_block_forward.2} parent=67 // pred_region
        %p1129 = scmp.lt.s32.totalorder %s22, 1
        %s1130 = scalar_select %p1129, %s22, 1
        %s1131 = smul.addr %s1130, 8
        %s1132 = scalar_lea.vmem %s10, %s1131
      $region72: #{mha_block_forward.2} parent=67 // pred_fallthru
        _
    $region68: #{mha_block_forward.2} parent=5 // pred_fallthru
      _
  $region6: #{mha_block_forward.2} parent=0 // loop_footer
    %s20 = sadd.s32 1, %s16
  $region7: #{mha_block_forward.2} parent=0 // loop_footer_branch
    %15 = sbr.rel target = $region3
  $region8: #{mha_block_forward.2} parent=0 // loop_exit
    _

</llo_original>
